<compile_context>
chip_gen: v6e
topology: v6e:2x2x1
jax: 0.10.0
libtpu: 0.0.40
codegen_flags: <defaults>
</compile_context>

<pallas_src>
import functools

import jax
import jax.numpy as jnp
from jax.experimental import pallas as pl
from jax.experimental.pallas import tpu as pltpu


def _bilinear_kernel(li_ref, ri_ref, wle_ref, ble_ref, wre_ref, bre_ref,
                     wb_ref, bb_ref, out_ref):
    """Fused (folded-Linear) bilinear forward: 3 lane-dense MXU matmuls, loop-free."""
    mxu_dtype = wle_ref.dtype  # f32, or bf16 when the prepped weights are bf16

    # l_exp[b, i*HR+j] = lout[b, i] ;  r_exp[b, i*HR+j] = rout[b, j]
    l_exp = jnp.dot(li_ref[...].astype(mxu_dtype), wle_ref[...],
                    preferred_element_type=jnp.float32) + ble_ref[...]      # (TB, K) f32
    r_exp = jnp.dot(ri_ref[...].astype(mxu_dtype), wre_ref[...],
                    preferred_element_type=jnp.float32) + bre_ref[...]      # (TB, K) f32

    # Batched outer product, flattened: t[b, i*HR+j] = lout[b,i] * rout[b,j]  (f32 VPU)
    t = l_exp * r_exp

    # Bilinear contraction as one K = HL*HR matmul (N padded to 128 lanes host-side).
    out = jnp.dot(t.astype(wb_ref.dtype), wb_ref[...],
                  preferred_element_type=jnp.float32) + bb_ref[...]         # (TB, O_pad)
    # TODO(synk): self.nlo defaults to identity; a non-trivial nlo would be applied here.
    out_ref[...] = out.astype(out_ref.dtype)


def prepare_bilinear_params(wl, bl, wr, br, wb_pt, bb, *,
                            mxu_dtype=jnp.float32, lane_pad=128):
    """One-time host-side parameter prep (call once per module, NOT once per forward).

    wl: (IN_L, HL), bl: (1, HL), wr: (IN_R, HR), br: (1, HR)
    wb_pt: PyTorch nn.Bilinear weight with layout (O, HL, HR), bb: (1, O)
    """
    IN_L, HL = wl.shape
    IN_R, HR = wr.shape
    O = wb_pt.shape[0]
    K = HL * HR
    O_pad = ((O + lane_pad - 1) // lane_pad) * lane_pad

    # Fold the Linear layers into the outer-product expansion (bit-exact column copies).
    wle = jnp.repeat(wl, HR, axis=1)            # (IN_L, K):  WLE[:, i*HR+j] = wl[:, i]
    ble = jnp.repeat(bl, HR, axis=1)            # (1, K)
    wre = jnp.tile(wr, (1, HL))                 # (IN_R, K):  WRE[:, i*HR+j] = wr[:, j]
    bre = jnp.tile(br, (1, HL))                 # (1, K)

    # nn.Bilinear weight (O, HL, HR) -> (K, O), zero-padded on lanes to O_pad.
    wb2d = jnp.transpose(wb_pt, (1, 2, 0)).reshape(K, O)
    wb2d = jnp.pad(wb2d, ((0, 0), (0, O_pad - O)))
    bb_p = jnp.pad(bb, ((0, 0), (0, O_pad - O)))

    return dict(
        wle=wle.astype(mxu_dtype), ble=ble.astype(jnp.float32),
        wre=wre.astype(mxu_dtype), bre=bre.astype(jnp.float32),
        wb2d=wb2d.astype(mxu_dtype), bb=bb_p.astype(jnp.float32),
    )


@functools.partial(jax.jit, static_argnames=("out_size", "tb"))
def bilinear_forward(linput, rinput, wle, ble, wre, bre, wb2d, bb, *,
                     out_size, tb=256):
    B, IN_L = linput.shape
    _, IN_R = rinput.shape
    K = wle.shape[1]
    O_pad = wb2d.shape[1]

    # Pad the batch to a multiple of the batch tile so the grid pipelines cleanly.
    nb = pl.cdiv(B, tb)
    b_pad = nb * tb
    if b_pad != B:
        linput = jnp.pad(linput, ((0, b_pad - B), (0, 0)))
        rinput = jnp.pad(rinput, ((0, b_pad - B), (0, 0)))

    grid_spec = pltpu.PrefetchScalarGridSpec(
        num_scalar_prefetch=0,
        grid=(nb,),
        in_specs=[
            pl.BlockSpec((tb, IN_L), lambda b: (b, 0)),   # activations: tiled over batch
            pl.BlockSpec((tb, IN_R), lambda b: (b, 0)),
            pl.BlockSpec((IN_L, K),  lambda b: (0, 0)),   # parameters: constant block idx
            pl.BlockSpec((1, K),     lambda b: (0, 0)),   #   -> VMEM-resident across steps
            pl.BlockSpec((IN_R, K),  lambda b: (0, 0)),
            pl.BlockSpec((1, K),     lambda b: (0, 0)),
            pl.BlockSpec((K, O_pad), lambda b: (0, 0)),
            pl.BlockSpec((1, O_pad), lambda b: (0, 0)),
        ],
        # O_pad is a multiple of 128 -> unmasked lane-dense output stores.
        out_specs=pl.BlockSpec((tb, O_pad), lambda b: (b, 0)),
    )

    out = pl.pallas_call(
        _bilinear_kernel,
        out_shape=jax.ShapeDtypeStruct((b_pad, O_pad), jnp.float32),
        grid_spec=grid_spec,
        compiler_params=pltpu.CompilerParams(
            # Batch axis is independent -> shard grid steps across both TCs on v7x.
            dimension_semantics=("parallel",),
        ),
    )(linput, rinput, wle, ble, wre, bre, wb2d, bb)
    return out[:B, :out_size]


if __name__ == "__main__":
    # Small-but-tiled shapes consistent with the module's forward.
    B, IN_L, IN_R = 512, 16, 24     # batch, left-module input dim, right-module input dim
    HL, HR, O = 32, 16, 12          # left_output_size, right_output_size, output_size
    TB = 256                        # batch tile -> grid=(2,): pipelined + both v7x TCs busy

    key = jax.random.PRNGKey(0)
    k = jax.random.split(key, 8)

    linput = jax.random.normal(k[0], (B, IN_L), jnp.float32)
    rinput = jax.random.normal(k[1], (B, IN_R), jnp.float32)

    # Deterministic "kaiming-normal"-style parameter init (synthetic, no checkpoint).
    wl = jax.random.normal(k[2], (IN_L, HL), jnp.float32) * (2.0 / IN_L) ** 0.5
    bl = jax.random.normal(k[3], (1, HL), jnp.float32) * 0.01
    wr = jax.random.normal(k[4], (IN_R, HR), jnp.float32) * (2.0 / IN_R) ** 0.5
    br = jax.random.normal(k[5], (1, HR), jnp.float32) * 0.01
    # PyTorch nn.Bilinear weight layout is (O, HL, HR).
    wb_pt = jax.random.normal(k[6], (O, HL, HR), jnp.float32) * (2.0 / HL) ** 0.5
    bb = jax.random.normal(k[7], (1, O), jnp.float32) * 0.01

    # Plain-JAX reference for sanity check.
    lout_ref = linput @ wl + bl
    rout_ref = rinput @ wr + br
    ref = jnp.einsum("bl,olr,br->bo", lout_ref, wb_pt, rout_ref) + bb

    # --- f32 MXU-operand path (tight tolerance) ---
    p32 = prepare_bilinear_params(wl, bl, wr, br, wb_pt, bb, mxu_dtype=jnp.float32)
    out32 = bilinear_forward(linput, rinput, p32["wle"], p32["ble"], p32["wre"],
                             p32["bre"], p32["wb2d"], p32["bb"], out_size=O, tb=TB)
    out32 = jax.block_until_ready(out32)
    assert out32.shape == (B, O)
    assert not jnp.isnan(out32).any()
    assert jnp.allclose(out32, ref, atol=1e-4, rtol=1e-4), (
        f"f32 max abs err {jnp.max(jnp.abs(out32 - ref))}")

    # --- bf16 MXU-operand path (v6e/v7x throughput; f32 accumulation, looser tolerance) ---
    pbf = prepare_bilinear_params(wl, bl, wr, br, wb_pt, bb, mxu_dtype=jnp.bfloat16)
    outbf = bilinear_forward(linput, rinput, pbf["wle"], pbf["ble"], pbf["wre"],
                             pbf["bre"], pbf["wb2d"], pbf["bb"], out_size=O, tb=TB)
    outbf = jax.block_until_ready(outbf)
    assert outbf.shape == (B, O)
    assert not jnp.isnan(outbf).any()
    assert jnp.allclose(outbf, ref, atol=0.5, rtol=5e-2), (
        f"bf16 max abs err {jnp.max(jnp.abs(outbf - ref))}")

    print("KERNEL_OK")
</pallas_src>

<mosaic_0001>
module attributes {stable_mosaic.version = 11 : i64} {
  func.func @_bilinear_kernel(%arg0: i32, %arg1: memref<256x16xf32, #tpu.memory_space<vmem>>, %arg2: memref<256x24xf32, #tpu.memory_space<vmem>>, %arg3: memref<16x512xf32, #tpu.memory_space<vmem>>, %arg4: memref<1x512xf32, #tpu.memory_space<vmem>>, %arg5: memref<24x512xf32, #tpu.memory_space<vmem>>, %arg6: memref<1x512xf32, #tpu.memory_space<vmem>>, %arg7: memref<512x128xf32, #tpu.memory_space<vmem>>, %arg8: memref<1x128xf32, #tpu.memory_space<vmem>>, %arg9: memref<256x128xf32, #tpu.memory_space<vmem>>) attributes {dimension_semantics = [#tpu.dimension_semantics<parallel>], iteration_bounds = array<i64: 2>, scalar_prefetch = 0 : i64, scratch_operands = 0 : i64, tpu.core_type = #tpu.core_type<tc>, window_params = [{transform_indices = @transform_0, window_bounds = array<i64: 256, 16>}, {transform_indices = @transform_1, window_bounds = array<i64: 256, 24>}, {pipeline_mode = #tpu.pipeline_mode<synchronous>, transform_indices = @transform_2, window_bounds = array<i64: 16, 512>}, {pipeline_mode = #tpu.pipeline_mode<synchronous>, transform_indices = @transform_3, window_bounds = array<i64: 1, 512>}, {pipeline_mode = #tpu.pipeline_mode<synchronous>, transform_indices = @transform_4, window_bounds = array<i64: 24, 512>}, {pipeline_mode = #tpu.pipeline_mode<synchronous>, transform_indices = @transform_5, window_bounds = array<i64: 1, 512>}, {pipeline_mode = #tpu.pipeline_mode<synchronous>, transform_indices = @transform_6, window_bounds = array<i64: 512, 128>}, {pipeline_mode = #tpu.pipeline_mode<synchronous>, transform_indices = @transform_7, window_bounds = array<i64: 1, 128>}, {transform_indices = @transform_8, window_bounds = array<i64: 256, 128>}]} {
    %c0 = arith.constant 0 : index
    %c0_0 = arith.constant 0 : index
    %0 = vector.load %arg1[%c0, %c0_0] : memref<256x16xf32, #tpu.memory_space<vmem>>, vector<256x16xf32>
    %c0_1 = arith.constant 0 : index
    %c0_2 = arith.constant 0 : index
    %1 = vector.load %arg3[%c0_1, %c0_2] : memref<16x512xf32, #tpu.memory_space<vmem>>, vector<16x512xf32>
    %cst = arith.constant dense<0.000000e+00> : vector<256x512xf32>
    %2 = tpu.matmul %0, %1, %cst {dimension_numbers = #tpu.dot_dimension_numbers<[1], [0], [0], [1], [0, 0, 1, 1], [], []>} : vector<256x16xf32>, vector<16x512xf32>, vector<256x512xf32> -> vector<256x512xf32>
    %c0_3 = arith.constant 0 : index
    %c0_4 = arith.constant 0 : index
    %3 = vector.load %arg4[%c0_3, %c0_4] : memref<1x512xf32, #tpu.memory_space<vmem>>, vector<1x512xf32>
    %4 = vector.broadcast %3 : vector<1x512xf32> to vector<256x512xf32>
    %5 = arith.addf %2, %4 : vector<256x512xf32>
    %c0_5 = arith.constant 0 : index
    %c0_6 = arith.constant 0 : index
    %6 = vector.load %arg2[%c0_5, %c0_6] : memref<256x24xf32, #tpu.memory_space<vmem>>, vector<256x24xf32>
    %c0_7 = arith.constant 0 : index
    %c0_8 = arith.constant 0 : index
    %7 = vector.load %arg5[%c0_7, %c0_8] : memref<24x512xf32, #tpu.memory_space<vmem>>, vector<24x512xf32>
    %cst_9 = arith.constant dense<0.000000e+00> : vector<256x512xf32>
    %8 = tpu.matmul %6, %7, %cst_9 {dimension_numbers = #tpu.dot_dimension_numbers<[1], [0], [0], [1], [0, 0, 1, 1], [], []>} : vector<256x24xf32>, vector<24x512xf32>, vector<256x512xf32> -> vector<256x512xf32>
    %c0_10 = arith.constant 0 : index
    %c0_11 = arith.constant 0 : index
    %9 = vector.load %arg6[%c0_10, %c0_11] : memref<1x512xf32, #tpu.memory_space<vmem>>, vector<1x512xf32>
    %10 = vector.broadcast %9 : vector<1x512xf32> to vector<256x512xf32>
    %11 = arith.addf %8, %10 : vector<256x512xf32>
    %12 = arith.mulf %5, %11 : vector<256x512xf32>
    %c0_12 = arith.constant 0 : index
    %c0_13 = arith.constant 0 : index
    %13 = vector.load %arg7[%c0_12, %c0_13] : memref<512x128xf32, #tpu.memory_space<vmem>>, vector<512x128xf32>
    %cst_14 = arith.constant dense<0.000000e+00> : vector<256x128xf32>
    %14 = tpu.matmul %12, %13, %cst_14 {dimension_numbers = #tpu.dot_dimension_numbers<[1], [0], [0], [1], [0, 0, 1, 1], [], []>} : vector<256x512xf32>, vector<512x128xf32>, vector<256x128xf32> -> vector<256x128xf32>
    %c0_15 = arith.constant 0 : index
    %c0_16 = arith.constant 0 : index
    %15 = vector.load %arg8[%c0_15, %c0_16] : memref<1x128xf32, #tpu.memory_space<vmem>>, vector<1x128xf32>
    %16 = vector.broadcast %15 : vector<1x128xf32> to vector<256x128xf32>
    %17 = arith.addf %14, %16 : vector<256x128xf32>
    %c0_17 = arith.constant 0 : index
    %c0_18 = arith.constant 0 : index
    %18 = vector.load %arg9[%c0_17, %c0_18] : memref<256x128xf32, #tpu.memory_space<vmem>>, vector<256x128xf32>
    tpu.vector_store %arg9[%c0_17, %c0_18], %17 {strides = array<i32>} : memref<256x128xf32, #tpu.memory_space<vmem>>, vector<256x128xf32>,
    return
  }
  func.func @transform_0(%arg0: i32) -> (i32, i32) {
    %c0_i32 = arith.constant 0 : i32
    %c0_i32_0 = arith.constant 0 : i32
    return %arg0, %c0_i32 : i32, i32
  }
  func.func @transform_1(%arg0: i32) -> (i32, i32) {
    %c0_i32 = arith.constant 0 : i32
    %c0_i32_0 = arith.constant 0 : i32
    return %arg0, %c0_i32 : i32, i32
  }
  func.func @transform_2(%arg0: i32) -> (i32, i32) {
    %c0_i32 = arith.constant 0 : i32
    %c0_i32_0 = arith.constant 0 : i32
    %c0_i32_1 = arith.constant 0 : i32
    return %c0_i32, %c0_i32_0 : i32, i32
  }
  func.func @transform_3(%arg0: i32) -> (i32, i32) {
    %c0_i32 = arith.constant 0 : i32
    %c0_i32_0 = arith.constant 0 : i32
    %c0_i32_1 = arith.constant 0 : i32
    return %c0_i32, %c0_i32_0 : i32, i32
  }
  func.func @transform_4(%arg0: i32) -> (i32, i32) {
    %c0_i32 = arith.constant 0 : i32
    %c0_i32_0 = arith.constant 0 : i32
    %c0_i32_1 = arith.constant 0 : i32
    return %c0_i32, %c0_i32_0 : i32, i32
  }
  func.func @transform_5(%arg0: i32) -> (i32, i32) {
    %c0_i32 = arith.constant 0 : i32
    %c0_i32_0 = arith.constant 0 : i32
    %c0_i32_1 = arith.constant 0 : i32
    return %c0_i32, %c0_i32_0 : i32, i32
  }
  func.func @transform_6(%arg0: i32) -> (i32, i32) {
    %c0_i32 = arith.constant 0 : i32
    %c0_i32_0 = arith.constant 0 : i32
    %c0_i32_1 = arith.constant 0 : i32
    return %c0_i32, %c0_i32_0 : i32, i32
  }
  func.func @transform_7(%arg0: i32) -> (i32, i32) {
    %c0_i32 = arith.constant 0 : i32
    %c0_i32_0 = arith.constant 0 : i32
    %c0_i32_1 = arith.constant 0 : i32
    return %c0_i32, %c0_i32_0 : i32, i32
  }
  func.func @transform_8(%arg0: i32) -> (i32, i32) {
    %c0_i32 = arith.constant 0 : i32
    %c0_i32_0 = arith.constant 0 : i32
    return %arg0, %c0_i32 : i32, i32
  }
}

</mosaic_0001>

<llo_original>
// kernel: bilinear_forward.1
$region0: #{bilinear_forward.1}
  #allocation0 [shape = 'u32[]', space=smem, size = 0x4, offset = 0x4, fixed_abs, tag = 'smem constant byte address 0x4 - core index']
  #allocation1 [shape = 'u32[144,128]{1,0:T(1,128)}', space=vmem, size = 0x12000, scoped, tag = 'internal scratch']
  %s0 = inlined_call_operand.vmem [shape: f32[512,16], index: 0, kind: input, shape index: {}]
  %s1 = inlined_call_operand.vmem [shape: f32[512,24], index: 1, kind: input, shape index: {}]
  %s2 = inlined_call_operand.vmem [shape: f32[16,512], index: 2, kind: input, shape index: {}]
  %s3 = inlined_call_operand.vmem [shape: f32[1,512], index: 3, kind: input, shape index: {}]
  %s4 = inlined_call_operand.vmem [shape: f32[24,512], index: 4, kind: input, shape index: {}]
  %s5 = inlined_call_operand.vmem [shape: f32[1,512], index: 5, kind: input, shape index: {}]
  %s6 = inlined_call_operand.vmem [shape: f32[512,128], index: 6, kind: input, shape index: {}]
  %s7 = inlined_call_operand.vmem [shape: f32[1,128], index: 7, kind: input, shape index: {}]
  %s8 = inlined_call_operand.vmem [shape: f32[512,128], index: 8, kind: output, shape index: {}]
  %s9 = sld [smem:[#allocation0]]
  $region65: #{bilinear_forward.1} parent=0
    _
  %s11 = ssub.s32 1, %s9
  %s12 = scalar_select 0, %s11, %s9
  loop: start=0, step=1, limit=4
  $region2: #{bilinear_forward.1} parent=0 // loop_pre_header
    _
  $region3: #{bilinear_forward.1} parent=0 // loop_header
    %s14 = sphi 0, %s18
    %p15 = scmp.ge.s32.totalorder %s14, 4
    %s24 = sphi 0, %s26
    %s27 = sphi 0, %s24
    %s28 = sphi 0, %s27
    %s44 = sphi 0, %s28
    %s50 = sphi 0, %s52
    %s53 = sphi 0, %s50
    %s54 = sphi 0, %s53
    %s70 = sphi 0, %s54
    %s74 = sphi 0, %s74
    %s76 = sphi 0, %s74
    %s77 = sphi 0, %s76
    %s91 = sphi 0, %s77
    %s95 = sphi 0, %s95
    %s97 = sphi 0, %s95
    %s98 = sphi 0, %s97
    %s112 = sphi 0, %s98
    %s116 = sphi 0, %s116
    %s118 = sphi 0, %s116
    %s119 = sphi 0, %s118
    %s133 = sphi 0, %s119
    %s137 = sphi 0, %s137
    %s139 = sphi 0, %s137
    %s140 = sphi 0, %s139
    %s154 = sphi 0, %s140
    %s158 = sphi 0, %s158
    %s160 = sphi 0, %s158
    %s161 = sphi 0, %s160
    %s175 = sphi 0, %s161
    %s179 = sphi 0, %s179
    %s181 = sphi 0, %s179
    %s182 = sphi 0, %s181
    %s196 = sphi 0, %s182
    %s202 = sphi 0, %s204
    %s205 = sphi 0, %s202
    %s206 = sphi 0, %s205
    %s222 = sphi 0, %s206
  $region4: #{bilinear_forward.1} parent=0 // loop_header_branch
    %17 = sbr.rel (%p15) target = $region8
  $region5: #{bilinear_forward.1} parent=0 // loop_body
    %s19 = ssub.s32 %s14, 1
    %s20 = ssub.s32 %s14, 2
    %s21 = sadd.s32 %s14, 1
    %s22 = ssub.s32 %s14, %s21
    %p23 = scmp.eq.s32.totalorder %s22, 0
    %s25 = sadd.s32 %s24, 1
    %s26 = scalar_select %p23, %s24, %s25
    %p29 = pneg %p23
    %p30 = scmp.eq.s32.totalorder %s14, 1
    %p31 = por %p29, %p30
    %p32 = scmp.ne.s32.totalorder %s24, %s27
    %p33 = scmp.eq.s32.totalorder %s14, 0
    %p34 = por %p32, %p33
    %p35 = scmp.ne.s32.totalorder %s24, %s27
    %p36 = scmp.eq.s32.totalorder %s19, 1
    %p37 = por %p35, %p36
    %p38 = scmp.ne.s32.totalorder %s27, %s28
    %p39 = scmp.eq.s32.totalorder %s19, 0
    %p40 = por %p38, %p39
    %p41 = scmp.ne.s32.totalorder %s27, %s28
    %p42 = scmp.eq.s32.totalorder %s20, 1
    %p43 = por %p41, %p42
    %p45 = scmp.ne.s32.totalorder %s28, %s44
    %p46 = scmp.eq.s32.totalorder %s20, 0
    %p47 = por %p45, %p46
    %s48 = ssub.s32 %s14, %s21
    %p49 = scmp.eq.s32.totalorder %s48, 0
    %s51 = sadd.s32 %s50, 1
    %s52 = scalar_select %p49, %s50, %s51
    %p55 = pneg %p49
    %p56 = scmp.eq.s32.totalorder %s14, 1
    %p57 = por %p55, %p56
    %p58 = scmp.ne.s32.totalorder %s50, %s53
    %p59 = scmp.eq.s32.totalorder %s14, 0
    %p60 = por %p58, %p59
    %p61 = scmp.ne.s32.totalorder %s50, %s53
    %p62 = scmp.eq.s32.totalorder %s19, 1
    %p63 = por %p61, %p62
    %p64 = scmp.ne.s32.totalorder %s53, %s54
    %p65 = scmp.eq.s32.totalorder %s19, 0
    %p66 = por %p64, %p65
    %p67 = scmp.ne.s32.totalorder %s53, %s54
    %p68 = scmp.eq.s32.totalorder %s20, 1
    %p69 = por %p67, %p68
    %p71 = scmp.ne.s32.totalorder %s54, %s70
    %p72 = scmp.eq.s32.totalorder %s20, 0
    %p73 = por %p71, %p72
    %s75 = sadd.s32 %s74, 1
    %p78 = scmp.eq.s32.totalorder %s14, 1
    %p79 = scmp.ne.s32.totalorder %s74, %s76
    %p80 = scmp.eq.s32.totalorder %s14, 0
    %p81 = por %p79, %p80
    %p82 = scmp.ne.s32.totalorder %s74, %s76
    %p83 = scmp.eq.s32.totalorder %s19, 1
    %p84 = por %p82, %p83
    %p85 = scmp.ne.s32.totalorder %s76, %s77
    %p86 = scmp.eq.s32.totalorder %s19, 0
    %p87 = por %p85, %p86
    %p88 = scmp.ne.s32.totalorder %s76, %s77
    %p89 = scmp.eq.s32.totalorder %s20, 1
    %p90 = por %p88, %p89
    %p92 = scmp.ne.s32.totalorder %s77, %s91
    %p93 = scmp.eq.s32.totalorder %s20, 0
    %p94 = por %p92, %p93
    %s96 = sadd.s32 %s95, 1
    %p99 = scmp.eq.s32.totalorder %s14, 1
    %p100 = scmp.ne.s32.totalorder %s95, %s97
    %p101 = scmp.eq.s32.totalorder %s14, 0
    %p102 = por %p100, %p101
    %p103 = scmp.ne.s32.totalorder %s95, %s97
    %p104 = scmp.eq.s32.totalorder %s19, 1
    %p105 = por %p103, %p104
    %p106 = scmp.ne.s32.totalorder %s97, %s98
    %p107 = scmp.eq.s32.totalorder %s19, 0
    %p108 = por %p106, %p107
    %p109 = scmp.ne.s32.totalorder %s97, %s98
    %p110 = scmp.eq.s32.totalorder %s20, 1
    %p111 = por %p109, %p110
    %p113 = scmp.ne.s32.totalorder %s98, %s112
    %p114 = scmp.eq.s32.totalorder %s20, 0
    %p115 = por %p113, %p114
    %s117 = sadd.s32 %s116, 1
    %p120 = scmp.eq.s32.totalorder %s14, 1
    %p121 = scmp.ne.s32.totalorder %s116, %s118
    %p122 = scmp.eq.s32.totalorder %s14, 0
    %p123 = por %p121, %p122
    %p124 = scmp.ne.s32.totalorder %s116, %s118
    %p125 = scmp.eq.s32.totalorder %s19, 1
    %p126 = por %p124, %p125
    %p127 = scmp.ne.s32.totalorder %s118, %s119
    %p128 = scmp.eq.s32.totalorder %s19, 0
    %p129 = por %p127, %p128
    %p130 = scmp.ne.s32.totalorder %s118, %s119
    %p131 = scmp.eq.s32.totalorder %s20, 1
    %p132 = por %p130, %p131
    %p134 = scmp.ne.s32.totalorder %s119, %s133
    %p135 = scmp.eq.s32.totalorder %s20, 0
    %p136 = por %p134, %p135
    %s138 = sadd.s32 %s137, 1
    %p141 = scmp.eq.s32.totalorder %s14, 1
    %p142 = scmp.ne.s32.totalorder %s137, %s139
    %p143 = scmp.eq.s32.totalorder %s14, 0
    %p144 = por %p142, %p143
    %p145 = scmp.ne.s32.totalorder %s137, %s139
    %p146 = scmp.eq.s32.totalorder %s19, 1
    %p147 = por %p145, %p146
    %p148 = scmp.ne.s32.totalorder %s139, %s140
    %p149 = scmp.eq.s32.totalorder %s19, 0
    %p150 = por %p148, %p149
    %p151 = scmp.ne.s32.totalorder %s139, %s140
    %p152 = scmp.eq.s32.totalorder %s20, 1
    %p153 = por %p151, %p152
    %p155 = scmp.ne.s32.totalorder %s140, %s154
    %p156 = scmp.eq.s32.totalorder %s20, 0
    %p157 = por %p155, %p156
    %s159 = sadd.s32 %s158, 1
    %p162 = scmp.eq.s32.totalorder %s14, 1
    %p163 = scmp.ne.s32.totalorder %s158, %s160
    %p164 = scmp.eq.s32.totalorder %s14, 0
    %p165 = por %p163, %p164
    %p166 = scmp.ne.s32.totalorder %s158, %s160
    %p167 = scmp.eq.s32.totalorder %s19, 1
    %p168 = por %p166, %p167
    %p169 = scmp.ne.s32.totalorder %s160, %s161
    %p170 = scmp.eq.s32.totalorder %s19, 0
    %p171 = por %p169, %p170
    %p172 = scmp.ne.s32.totalorder %s160, %s161
    %p173 = scmp.eq.s32.totalorder %s20, 1
    %p174 = por %p172, %p173
    %p176 = scmp.ne.s32.totalorder %s161, %s175
    %p177 = scmp.eq.s32.totalorder %s20, 0
    %p178 = por %p176, %p177
    %s180 = sadd.s32 %s179, 1
    %p183 = scmp.eq.s32.totalorder %s14, 1
    %p184 = scmp.ne.s32.totalorder %s179, %s181
    %p185 = scmp.eq.s32.totalorder %s14, 0
    %p186 = por %p184, %p185
    %p187 = scmp.ne.s32.totalorder %s179, %s181
    %p188 = scmp.eq.s32.totalorder %s19, 1
    %p189 = por %p187, %p188
    %p190 = scmp.ne.s32.totalorder %s181, %s182
    %p191 = scmp.eq.s32.totalorder %s19, 0
    %p192 = por %p190, %p191
    %p193 = scmp.ne.s32.totalorder %s181, %s182
    %p194 = scmp.eq.s32.totalorder %s20, 1
    %p195 = por %p193, %p194
    %p197 = scmp.ne.s32.totalorder %s182, %s196
    %p198 = scmp.eq.s32.totalorder %s20, 0
    %p199 = por %p197, %p198
    %s200 = ssub.s32 %s14, %s21
    %p201 = scmp.eq.s32.totalorder %s200, 0
    %s203 = sadd.s32 %s202, 1
    %s204 = scalar_select %p201, %s202, %s203
    %p207 = pneg %p201
    %p208 = scmp.eq.s32.totalorder %s14, 1
    %p209 = por %p207, %p208
    %p210 = scmp.ne.s32.totalorder %s202, %s205
    %p211 = scmp.eq.s32.totalorder %s14, 0
    %p212 = por %p210, %p211
    %p213 = scmp.ne.s32.totalorder %s202, %s205
    %p214 = scmp.eq.s32.totalorder %s19, 1
    %p215 = por %p213, %p214
    %p216 = scmp.ne.s32.totalorder %s205, %s206
    %p217 = scmp.eq.s32.totalorder %s19, 0
    %p218 = por %p216, %p217
    %p219 = scmp.ne.s32.totalorder %s205, %s206
    %p220 = scmp.eq.s32.totalorder %s20, 1
    %p221 = por %p219, %p220
    %p223 = scmp.ne.s32.totalorder %s206, %s222
    %p224 = scmp.eq.s32.totalorder %s20, 0
    %p225 = por %p223, %p224
    %p226 = scmp.le.s32.totalorder 1, %s14
    %p227 = scmp.lt.s32.totalorder %s14, 3
    %p228 = pnand %p226, %p227
    %p229 = pneg %p228
    // Predicated region
    $region9: #{bilinear_forward.1} parent=5 // pred_check
      _
    $region10: #{bilinear_forward.1} parent=5 // pred_check_branch
      %231 = sbr.rel (%p228) target = $region12
    $region11: #{bilinear_forward.1} parent=5 // pred_region
      %s232 = ssub.s32 %s14, 1
      // Predicated region
      $region13: #{bilinear_forward.1} parent=11 // pred_check
        %p233 = pneg %p87
      $region14: #{bilinear_forward.1} parent=11 // pred_check_branch
        %235 = sbr.rel (%p233) target = $region16
      $region15: #{bilinear_forward.1} parent=11 // pred_region
        _
      $region16: #{bilinear_forward.1} parent=11 // pred_fallthru
        _
      // Predicated region
      $region17: #{bilinear_forward.1} parent=11 // pred_check
        %p236 = pneg %p108
      $region18: #{bilinear_forward.1} parent=11 // pred_check_branch
        %238 = sbr.rel (%p236) target = $region20
      $region19: #{bilinear_forward.1} parent=11 // pred_region
        _
      $region20: #{bilinear_forward.1} parent=11 // pred_fallthru
        _
      // Predicated region
      $region21: #{bilinear_forward.1} parent=11 // pred_check
        %p239 = pneg %p129
      $region22: #{bilinear_forward.1} parent=11 // pred_check_branch
        %241 = sbr.rel (%p239) target = $region24
      $region23: #{bilinear_forward.1} parent=11 // pred_region
        _
      $region24: #{bilinear_forward.1} parent=11 // pred_fallthru
        _
      // Predicated region
      $region25: #{bilinear_forward.1} parent=11 // pred_check
        %p242 = pneg %p150
      $region26: #{bilinear_forward.1} parent=11 // pred_check_branch
        %244 = sbr.rel (%p242) target = $region28
      $region27: #{bilinear_forward.1} parent=11 // pred_region
        _
      $region28: #{bilinear_forward.1} parent=11 // pred_fallthru
        _
      // Predicated region
      $region29: #{bilinear_forward.1} parent=11 // pred_check
        %p245 = pneg %p171
      $region30: #{bilinear_forward.1} parent=11 // pred_check_branch
        %247 = sbr.rel (%p245) target = $region32
      $region31: #{bilinear_forward.1} parent=11 // pred_region
        _
      $region32: #{bilinear_forward.1} parent=11 // pred_fallthru
        _
      // Predicated region
      $region33: #{bilinear_forward.1} parent=11 // pred_check
        %p248 = pneg %p192
      $region34: #{bilinear_forward.1} parent=11 // pred_check_branch
        %250 = sbr.rel (%p248) target = $region36
      $region35: #{bilinear_forward.1} parent=11 // pred_region
        _
      $region36: #{bilinear_forward.1} parent=11 // pred_fallthru
        _
    $region12: #{bilinear_forward.1} parent=5 // pred_fallthru
      _
    %p251 = scmp.lt.s32.totalorder %s14, 2
    // Predicated region
    $region37: #{bilinear_forward.1} parent=5 // pred_check
      %p252 = pneg %p251
    $region38: #{bilinear_forward.1} parent=5 // pred_check_branch
      %254 = sbr.rel (%p252) target = $region40
    $region39: #{bilinear_forward.1} parent=5 // pred_region
      // Predicated region
      $region41: #{bilinear_forward.1} parent=39 // pred_check
        %p255 = pneg %p34
      $region42: #{bilinear_forward.1} parent=39 // pred_check_branch
        %257 = sbr.rel (%p255) target = $region44
      $region43: #{bilinear_forward.1} parent=39 // pred_region
        %s258 = smul.u32 32, %s14
        %p259 = scmp.lt.s32.totalorder %s258, 63
        %s260 = scalar_select %p259, %s258, 63
        %s261 = smul.addr %s260, 8
        %s262 = scalar_lea.vmem %s0, %s261
        %s263 = smul.u32 32, %s14
      $region44: #{bilinear_forward.1} parent=39 // pred_fallthru
        _
      // Predicated region
      $region45: #{bilinear_forward.1} parent=39 // pred_check
        %p264 = pneg %p60
      $region46: #{bilinear_forward.1} parent=39 // pred_check_branch
        %266 = sbr.rel (%p264) target = $region48
      $region47: #{bilinear_forward.1} parent=39 // pred_region
        %s267 = smul.u32 32, %s14
        %p268 = scmp.lt.s32.totalorder %s267, 63
        %s269 = scalar_select %p268, %s267, 63
        %s270 = smul.addr %s269, 8
        %s271 = scalar_lea.vmem %s1, %s270
        %s272 = smul.u32 32, %s14
      $region48: #{bilinear_forward.1} parent=39 // pred_fallthru
        _
    $region40: #{bilinear_forward.1} parent=5 // pred_fallthru
      _
    %p273 = scmp.le.s32.totalorder 1, %s14
    %p274 = scmp.lt.s32.totalorder %s14, 3
    %p275 = pnand %p273, %p274
    %p276 = pneg %p275
    // Predicated region
    $region49: #{bilinear_forward.1} parent=5 // pred_check
      _
    $region50: #{bilinear_forward.1} parent=5 // pred_check_branch
      %278 = sbr.rel (%p275) target = $region52
    $region51: #{bilinear_forward.1} parent=5 // pred_region
      %s279 = ssub.s32 %s14, 1
      %s280 = smul.u32 32, %s19
      %p281 = scmp.lt.s32.totalorder %s280, 63
      %s282 = scalar_select %p281, %s280, 63
      %s283 = smul.addr %s282, 8
      %s284 = scalar_lea.vmem %s0, %s283
      %p285 = pneg %p40
      %p286 = pneg %p37
      %s287 = smul.u32 32, %s19
      %p288 = scmp.lt.s32.totalorder %s287, 63
      %s289 = scalar_select %p288, %s287, 63
      %s290 = smul.addr %s289, 8
      %s291 = scalar_lea.vmem %s1, %s290
      %p292 = pneg %p66
      %p293 = pneg %p63
      %p294 = pneg %p87
      %p295 = pneg %p84
      %p296 = pneg %p108
      %p297 = pneg %p105
      %p298 = pneg %p129
      %p299 = pneg %p126
      %p300 = pneg %p150
      %p301 = pneg %p147
      %p302 = pneg %p171
      %p303 = pneg %p168
      %p304 = pneg %p192
      %p305 = pneg %p189
      %p306 = pneg %p218
      %p307 = pneg %p215
      %s308 = smul.u32 32, %s19
      %p309 = scmp.lt.s32.totalorder %s308, 63
      %s310 = scalar_select %p309, %s308, 63
      %s311 = smul.addr %s310, 8
      %s312 = scalar_lea.vmem %s8, %s311
      %s313 = smul.u32 32, %s19
      %p314 = scmp.lt.s32.totalorder %s313, 63
      %s315 = scalar_select %p314, %s313, 63
      %s316 = smul.addr %s315, 8
      %s317 = scalar_lea.vmem %s0, %s316
      %s318 = smul.u32 32, %s19
      %s319 = smul.u32 32, %s19
      %p320 = scmp.lt.s32.totalorder %s319, 63
      %s321 = scalar_select %p320, %s319, 63
      %s322 = smul.addr %s321, 8
      %s323 = scalar_lea.vmem %s1, %s322
      %s324 = smul.u32 32, %s19
      %s325 = smul.u32 32, %s19
      %p326 = scmp.lt.s32.totalorder %s325, 63
      %s327 = scalar_select %p326, %s325, 63
      %s328 = smul.addr %s327, 8
      %s329 = scalar_lea.vmem %s8, %s328
      %s330 = smul.u32 32, %s19
      %v331 = vld [vmem:[%s317] sm:$0xff]
      %v332 = vld [vmem:[%s317 + $0x8] sm:$0xff]
      %v333 = vld [vmem:[%s317 + $0x10] sm:$0xff]
      %v334 = vld [vmem:[%s317 + $0x18] sm:$0xff]
      %v335 = vld [vmem:[%s317 + $0x20] sm:$0xff]
      %v336 = vld [vmem:[%s317 + $0x28] sm:$0xff]
      %v337 = vld [vmem:[%s317 + $0x30] sm:$0xff]
      %v338 = vld [vmem:[%s317 + $0x38] sm:$0xff]
      %v339 = vld [vmem:[%s317 + $0x40] sm:$0xff]
      %v340 = vld [vmem:[%s317 + $0x48] sm:$0xff]
      %v341 = vld [vmem:[%s317 + $0x50] sm:$0xff]
      %v342 = vld [vmem:[%s317 + $0x58] sm:$0xff]
      %v343 = vld [vmem:[%s317 + $0x60] sm:$0xff]
      %v344 = vld [vmem:[%s317 + $0x68] sm:$0xff]
      %v345 = vld [vmem:[%s317 + $0x70] sm:$0xff]
      %v346 = vld [vmem:[%s317 + $0x78] sm:$0xff]
      %v347 = vld [vmem:[%s317 + $0x80] sm:$0xff]
      %v348 = vld [vmem:[%s317 + $0x88] sm:$0xff]
      %v349 = vld [vmem:[%s317 + $0x90] sm:$0xff]
      %v350 = vld [vmem:[%s317 + $0x98] sm:$0xff]
      %v351 = vld [vmem:[%s317 + $0xa0] sm:$0xff]
      %v352 = vld [vmem:[%s317 + $0xa8] sm:$0xff]
      %v353 = vld [vmem:[%s317 + $0xb0] sm:$0xff]
      %v354 = vld [vmem:[%s317 + $0xb8] sm:$0xff]
      %v355 = vld [vmem:[%s317 + $0xc0] sm:$0xff]
      %v356 = vld [vmem:[%s317 + $0xc8] sm:$0xff]
      %v357 = vld [vmem:[%s317 + $0xd0] sm:$0xff]
      %v358 = vld [vmem:[%s317 + $0xd8] sm:$0xff]
      %v359 = vld [vmem:[%s317 + $0xe0] sm:$0xff]
      %v360 = vld [vmem:[%s317 + $0xe8] sm:$0xff]
      %v361 = vld [vmem:[%s317 + $0xf0] sm:$0xff]
      %v362 = vld [vmem:[%s317 + $0xf8] sm:$0xff]
      %v363 = vld [vmem:[%s2] sm:$0xff]
      %v364 = vld [vmem:[%s2 + $0x8] sm:$0xff]
      %v365 = vld [vmem:[%s2 + $0x10] sm:$0xff]
      %v366 = vld [vmem:[%s2 + $0x18] sm:$0xff]
      %v367 = vld [vmem:[%s2 + $0x20] sm:$0xff]
      %v368 = vld [vmem:[%s2 + $0x28] sm:$0xff]
      %v369 = vld [vmem:[%s2 + $0x30] sm:$0xff]
      %v370 = vld [vmem:[%s2 + $0x38] sm:$0xff]
      %v371 = vld [vmem:[%s3] sm:$0xf]
      %v373 = vlaneseq
      %v374 = vshrl.u32 %v373, 7
      %v375 = vsub.s32 0, %v374
      %v376 = vrot.slane %v371, %v375
      %v377 = vlaneseq
      %v378 = vshrl.u32 %v377, 7
      %v379 = vsub.s32 1, %v378
      %v380 = vrot.slane %v371, %v379
      %v381 = vlaneseq
      %v382 = vshrl.u32 %v381, 7
      %v383 = vsub.s32 2, %v382
      %v384 = vrot.slane %v371, %v383
      %v385 = vlaneseq
      %v386 = vshrl.u32 %v385, 7
      %v387 = vsub.s32 3, %v386
      %v388 = vrot.slane %v371, %v387
      %vm393 = vcmask 130048
      %v395 = vsel %vm393, %v331, 0
      %v398 = vsel %vm393, %v332, 0
      %v401 = vsel %vm393, %v333, 0
      %v404 = vsel %vm393, %v334, 0
      %v407 = vsel %vm393, %v335, 0
      %v410 = vsel %vm393, %v336, 0
      %v413 = vsel %vm393, %v337, 0
      %v416 = vsel %vm393, %v338, 0
      %v419 = vsel %vm393, %v339, 0
      %v422 = vsel %vm393, %v340, 0
      %v425 = vsel %vm393, %v341, 0
      %v428 = vsel %vm393, %v342, 0
      %v431 = vsel %vm393, %v343, 0
      %v434 = vsel %vm393, %v344, 0
      %v437 = vsel %vm393, %v345, 0
      %v440 = vsel %vm393, %v346, 0
      %v443 = vsel %vm393, %v347, 0
      %v446 = vsel %vm393, %v348, 0
      %v449 = vsel %vm393, %v349, 0
      %v452 = vsel %vm393, %v350, 0
      %v455 = vsel %vm393, %v351, 0
      %v458 = vsel %vm393, %v352, 0
      %v461 = vsel %vm393, %v353, 0
      %v464 = vsel %vm393, %v354, 0
      %v467 = vsel %vm393, %v355, 0
      %v470 = vsel %vm393, %v356, 0
      %v473 = vsel %vm393, %v357, 0
      %v476 = vsel %vm393, %v358, 0
      %v479 = vsel %vm393, %v359, 0
      %v482 = vsel %vm393, %v360, 0
      %v485 = vsel %vm393, %v361, 0
      %v488 = vsel %vm393, %v362, 0
      %490 = vmatprep.subr.mxu0 0.0
      %491 = vmatpush1.msra.mxu0 0.0
      %492 = vmatprep.subr.mxu0 0.0
      %493 = vmatpush1.msra.mxu0 0.0
      %494 = vmatprep.subr.mxu0 0.0
      %495 = vmatpush1.msra.mxu0 0.0
      %496 = vmatprep.subr.mxu0 0.0
      %497 = vmatpush1.msra.mxu0 0.0
      %498 = vmatprep.subr.mxu0 0.0
      %499 = vmatpush1.msra.mxu0 0.0
      %500 = vmatprep.subr.mxu0 0.0
      %501 = vmatpush1.msra.mxu0 0.0
      %502 = vmatprep.subr.mxu0 0.0
      %503 = vmatpush1.msra.mxu0 0.0
      %504 = vmatprep.subr.mxu0 0.0
      %505 = vmatpush1.msra.mxu0 0.0
      %506 = vmatprep.subr.mxu0 0.0
      %507 = vmatpush1.msra.mxu0 0.0
      %508 = vmatprep.subr.mxu0 0.0
      %509 = vmatpush1.msra.mxu0 0.0
      %510 = vmatprep.subr.mxu0 0.0
      %511 = vmatpush1.msra.mxu0 0.0
      %512 = vmatprep.subr.mxu0 0.0
      %513 = vmatpush1.msra.mxu0 0.0
      %514 = vmatprep.subr.mxu0 0.0
      %515 = vmatpush1.msra.mxu0 0.0
      %516 = vmatprep.subr.mxu0 0.0
      %517 = vmatpush1.msra.mxu0 0.0
      %518 = vmatprep.subr.mxu0 %v368
      %519 = vmatpush1.msra.mxu0 %v367
      %520 = vmatprep.subr.mxu0 %v364
      %521 = vmatpush1.msra.mxu0 %v363
      %522 = vmatprep.subr.mxu0 0.0
      %523 = vmatpush2.msra.mxu0 0.0
      %524 = vmatprep.subr.mxu0 0.0
      %525 = vmatpush2.msra.mxu0 0.0
      %526 = vmatprep.subr.mxu0 0.0
      %527 = vmatpush2.msra.mxu0 0.0
      %528 = vmatprep.subr.mxu0 0.0
      %529 = vmatpush2.msra.mxu0 0.0
      %530 = vmatprep.subr.mxu0 0.0
      %531 = vmatpush2.msra.mxu0 0.0
      %532 = vmatprep.subr.mxu0 0.0
      %533 = vmatpush2.msra.mxu0 0.0
      %534 = vmatprep.subr.mxu0 0.0
      %535 = vmatpush2.msra.mxu0 0.0
      %536 = vmatprep.subr.mxu0 0.0
      %537 = vmatpush2.msra.mxu0 0.0
      %538 = vmatprep.subr.mxu0 0.0
      %539 = vmatpush2.msra.mxu0 0.0
      %540 = vmatprep.subr.mxu0 0.0
      %541 = vmatpush2.msra.mxu0 0.0
      %542 = vmatprep.subr.mxu0 0.0
      %543 = vmatpush2.msra.mxu0 0.0
      %544 = vmatprep.subr.mxu0 0.0
      %545 = vmatpush2.msra.mxu0 0.0
      %546 = vmatprep.subr.mxu0 0.0
      %547 = vmatpush2.msra.mxu0 0.0
      %548 = vmatprep.subr.mxu0 0.0
      %549 = vmatpush2.msra.mxu0 0.0
      %550 = vmatprep.subr.mxu0 0.0
      %551 = vmatpush2.msra.mxu0 0.0
      %552 = vmatprep.subr.mxu0 0.0
      %553 = vmatpush2.msra.mxu0 0.0
      %554 = vmatprep.mubr.f32.mxu0 0.0
      %555 = vmatmul.mubr.f32.gmra.mxu0 %v395
      %v556 = vpop.f32.mrf.mxu0
      %v557 = vadd.f32 %v376, %v556
      %v558 = vpop.f32.mrf.mxu0
      %v559 = vadd.f32 %v380, %v558
      %560 = vmatprep.mubr.f32.mxu0 0.0
      %561 = vmatmul.mubr.f32.gmra.mxu0 %v398
      %v562 = vpop.f32.mrf.mxu0
      %v563 = vadd.f32 %v376, %v562
      %v564 = vpop.f32.mrf.mxu0
      %v565 = vadd.f32 %v380, %v564
      %566 = vmatprep.mubr.f32.mxu0 0.0
      %567 = vmatmul.mubr.f32.gmra.mxu0 %v401
      %v568 = vpop.f32.mrf.mxu0
      %v569 = vadd.f32 %v376, %v568
      %v570 = vpop.f32.mrf.mxu0
      %v571 = vadd.f32 %v380, %v570
      %572 = vmatprep.mubr.f32.mxu0 0.0
      %573 = vmatmul.mubr.f32.gmra.mxu0 %v404
      %v574 = vpop.f32.mrf.mxu0
      %v575 = vadd.f32 %v376, %v574
      %v576 = vpop.f32.mrf.mxu0
      %v577 = vadd.f32 %v380, %v576
      %578 = vmatprep.mubr.f32.mxu0 0.0
      %579 = vmatmul.mubr.f32.gmra.mxu0 %v407
      %v580 = vpop.f32.mrf.mxu0
      %v581 = vadd.f32 %v376, %v580
      %v582 = vpop.f32.mrf.mxu0
      %v583 = vadd.f32 %v380, %v582
      %584 = vmatprep.mubr.f32.mxu0 0.0
      %585 = vmatmul.mubr.f32.gmra.mxu0 %v410
      %v586 = vpop.f32.mrf.mxu0
      %v587 = vadd.f32 %v376, %v586
      %v588 = vpop.f32.mrf.mxu0
      %v589 = vadd.f32 %v380, %v588
      %590 = vmatprep.mubr.f32.mxu0 0.0
      %591 = vmatmul.mubr.f32.gmra.mxu0 %v413
      %v592 = vpop.f32.mrf.mxu0
      %v593 = vadd.f32 %v376, %v592
      %v594 = vpop.f32.mrf.mxu0
      %v595 = vadd.f32 %v380, %v594
      %596 = vmatprep.mubr.f32.mxu0 0.0
      %597 = vmatmul.mubr.f32.gmra.mxu0 %v416
      %v598 = vpop.f32.mrf.mxu0
      %v599 = vadd.f32 %v376, %v598
      %v600 = vpop.f32.mrf.mxu0
      %v601 = vadd.f32 %v380, %v600
      %602 = vmatprep.mubr.f32.mxu0 0.0
      %603 = vmatmul.mubr.f32.gmra.mxu0 %v419
      %v604 = vpop.f32.mrf.mxu0
      %v605 = vadd.f32 %v376, %v604
      %v606 = vpop.f32.mrf.mxu0
      %v607 = vadd.f32 %v380, %v606
      %608 = vmatprep.mubr.f32.mxu0 0.0
      %609 = vmatmul.mubr.f32.gmra.mxu0 %v422
      %v610 = vpop.f32.mrf.mxu0
      %v611 = vadd.f32 %v376, %v610
      %v612 = vpop.f32.mrf.mxu0
      %v613 = vadd.f32 %v380, %v612
      %614 = vmatprep.mubr.f32.mxu0 0.0
      %615 = vmatmul.mubr.f32.gmra.mxu0 %v425
      %v616 = vpop.f32.mrf.mxu0
      %v617 = vadd.f32 %v376, %v616
      %v618 = vpop.f32.mrf.mxu0
      %v619 = vadd.f32 %v380, %v618
      %620 = vmatprep.mubr.f32.mxu0 0.0
      %621 = vmatmul.mubr.f32.gmra.mxu0 %v428
      %v622 = vpop.f32.mrf.mxu0
      %v623 = vadd.f32 %v376, %v622
      %v624 = vpop.f32.mrf.mxu0
      %v625 = vadd.f32 %v380, %v624
      %626 = vmatprep.mubr.f32.mxu0 0.0
      %627 = vmatmul.mubr.f32.gmra.mxu0 %v431
      %v628 = vpop.f32.mrf.mxu0
      %v629 = vadd.f32 %v376, %v628
      %v630 = vpop.f32.mrf.mxu0
      %v631 = vadd.f32 %v380, %v630
      %632 = vmatprep.mubr.f32.mxu0 0.0
      %633 = vmatmul.mubr.f32.gmra.mxu0 %v434
      %v634 = vpop.f32.mrf.mxu0
      %v635 = vadd.f32 %v376, %v634
      %v636 = vpop.f32.mrf.mxu0
      %v637 = vadd.f32 %v380, %v636
      %638 = vmatprep.mubr.f32.mxu0 0.0
      %639 = vmatmul.mubr.f32.gmra.mxu0 %v437
      %v640 = vpop.f32.mrf.mxu0
      %v641 = vadd.f32 %v376, %v640
      %v642 = vpop.f32.mrf.mxu0
      %v643 = vadd.f32 %v380, %v642
      %644 = vmatprep.mubr.f32.mxu0 0.0
      %645 = vmatmul.mubr.f32.gmra.mxu0 %v440
      %v646 = vpop.f32.mrf.mxu0
      %v647 = vadd.f32 %v376, %v646
      %v648 = vpop.f32.mrf.mxu0
      %v649 = vadd.f32 %v380, %v648
      %650 = vmatprep.mubr.f32.mxu0 0.0
      %651 = vmatmul.mubr.f32.gmra.mxu0 %v443
      %v652 = vpop.f32.mrf.mxu0
      %v653 = vadd.f32 %v376, %v652
      %v654 = vpop.f32.mrf.mxu0
      %v655 = vadd.f32 %v380, %v654
      %656 = vmatprep.mubr.f32.mxu0 0.0
      %657 = vmatmul.mubr.f32.gmra.mxu0 %v446
      %v658 = vpop.f32.mrf.mxu0
      %v659 = vadd.f32 %v376, %v658
      %v660 = vpop.f32.mrf.mxu0
      %v661 = vadd.f32 %v380, %v660
      %662 = vmatprep.mubr.f32.mxu0 0.0
      %663 = vmatmul.mubr.f32.gmra.mxu0 %v449
      %v664 = vpop.f32.mrf.mxu0
      %v665 = vadd.f32 %v376, %v664
      %v666 = vpop.f32.mrf.mxu0
      %v667 = vadd.f32 %v380, %v666
      %668 = vmatprep.mubr.f32.mxu0 0.0
      %669 = vmatmul.mubr.f32.gmra.mxu0 %v452
      %v670 = vpop.f32.mrf.mxu0
      %v671 = vadd.f32 %v376, %v670
      %v672 = vpop.f32.mrf.mxu0
      %v673 = vadd.f32 %v380, %v672
      %674 = vmatprep.mubr.f32.mxu0 0.0
      %675 = vmatmul.mubr.f32.gmra.mxu0 %v455
      %v676 = vpop.f32.mrf.mxu0
      %v677 = vadd.f32 %v376, %v676
      %v678 = vpop.f32.mrf.mxu0
      %v679 = vadd.f32 %v380, %v678
      %680 = vmatprep.mubr.f32.mxu0 0.0
      %681 = vmatmul.mubr.f32.gmra.mxu0 %v458
      %v682 = vpop.f32.mrf.mxu0
      %v683 = vadd.f32 %v376, %v682
      %v684 = vpop.f32.mrf.mxu0
      %v685 = vadd.f32 %v380, %v684
      %686 = vmatprep.mubr.f32.mxu0 0.0
      %687 = vmatmul.mubr.f32.gmra.mxu0 %v461
      %v688 = vpop.f32.mrf.mxu0
      %v689 = vadd.f32 %v376, %v688
      %v690 = vpop.f32.mrf.mxu0
      %v691 = vadd.f32 %v380, %v690
      %692 = vmatprep.mubr.f32.mxu0 0.0
      %693 = vmatmul.mubr.f32.gmra.mxu0 %v464
      %v694 = vpop.f32.mrf.mxu0
      %v695 = vadd.f32 %v376, %v694
      %v696 = vpop.f32.mrf.mxu0
      %v697 = vadd.f32 %v380, %v696
      %698 = vmatprep.mubr.f32.mxu0 0.0
      %699 = vmatmul.mubr.f32.gmra.mxu0 %v467
      %v700 = vpop.f32.mrf.mxu0
      %v701 = vadd.f32 %v376, %v700
      %v702 = vpop.f32.mrf.mxu0
      %v703 = vadd.f32 %v380, %v702
      %704 = vmatprep.mubr.f32.mxu0 0.0
      %705 = vmatmul.mubr.f32.gmra.mxu0 %v470
      %v706 = vpop.f32.mrf.mxu0
      %v707 = vadd.f32 %v376, %v706
      %v708 = vpop.f32.mrf.mxu0
      %v709 = vadd.f32 %v380, %v708
      %710 = vmatprep.mubr.f32.mxu0 0.0
      %711 = vmatmul.mubr.f32.gmra.mxu0 %v473
      %v712 = vpop.f32.mrf.mxu0
      %v713 = vadd.f32 %v376, %v712
      %v714 = vpop.f32.mrf.mxu0
      %v715 = vadd.f32 %v380, %v714
      %716 = vmatprep.mubr.f32.mxu0 0.0
      %717 = vmatmul.mubr.f32.gmra.mxu0 %v476
      %v718 = vpop.f32.mrf.mxu0
      %v719 = vadd.f32 %v376, %v718
      %v720 = vpop.f32.mrf.mxu0
      %v721 = vadd.f32 %v380, %v720
      %722 = vmatprep.mubr.f32.mxu0 0.0
      %723 = vmatmul.mubr.f32.gmra.mxu0 %v479
      %v724 = vpop.f32.mrf.mxu0
      %v725 = vadd.f32 %v376, %v724
      %v726 = vpop.f32.mrf.mxu0
      %v727 = vadd.f32 %v380, %v726
      %728 = vmatprep.mubr.f32.mxu0 0.0
      %729 = vmatmul.mubr.f32.gmra.mxu0 %v482
      %v730 = vpop.f32.mrf.mxu0
      %v731 = vadd.f32 %v376, %v730
      %v732 = vpop.f32.mrf.mxu0
      %v733 = vadd.f32 %v380, %v732
      %734 = vmatprep.mubr.f32.mxu0 0.0
      %735 = vmatmul.mubr.f32.gmra.mxu0 %v485
      %v736 = vpop.f32.mrf.mxu0
      %v737 = vadd.f32 %v376, %v736
      %v738 = vpop.f32.mrf.mxu0
      %v739 = vadd.f32 %v380, %v738
      %740 = vmatprep.mubr.f32.mxu0 0.0
      %741 = vmatmul.mubr.f32.gmra.mxu0 %v488
      %v742 = vpop.f32.mrf.mxu0
      %v743 = vadd.f32 %v376, %v742
      %v744 = vpop.f32.mrf.mxu0
      %v745 = vadd.f32 %v380, %v744
      %746 = vdwg.mxu0
      %747 = vmatprep.subr.mxu0 0.0
      %748 = vmatpush1.msra.mxu0 0.0
      %749 = vmatprep.subr.mxu0 0.0
      %750 = vmatpush1.msra.mxu0 0.0
      %751 = vmatprep.subr.mxu0 0.0
      %752 = vmatpush1.msra.mxu0 0.0
      %753 = vmatprep.subr.mxu0 0.0
      %754 = vmatpush1.msra.mxu0 0.0
      %755 = vmatprep.subr.mxu0 0.0
      %756 = vmatpush1.msra.mxu0 0.0
      %757 = vmatprep.subr.mxu0 0.0
      %758 = vmatpush1.msra.mxu0 0.0
      %759 = vmatprep.subr.mxu0 0.0
      %760 = vmatpush1.msra.mxu0 0.0
      %761 = vmatprep.subr.mxu0 0.0
      %762 = vmatpush1.msra.mxu0 0.0
      %763 = vmatprep.subr.mxu0 0.0
      %764 = vmatpush1.msra.mxu0 0.0
      %765 = vmatprep.subr.mxu0 0.0
      %766 = vmatpush1.msra.mxu0 0.0
      %767 = vmatprep.subr.mxu0 0.0
      %768 = vmatpush1.msra.mxu0 0.0
      %769 = vmatprep.subr.mxu0 0.0
      %770 = vmatpush1.msra.mxu0 0.0
      %771 = vmatprep.subr.mxu0 0.0
      %772 = vmatpush1.msra.mxu0 0.0
      %773 = vmatprep.subr.mxu0 0.0
      %774 = vmatpush1.msra.mxu0 0.0
      %775 = vmatprep.subr.mxu0 %v370
      %776 = vmatpush1.msra.mxu0 %v369
      %777 = vmatprep.subr.mxu0 %v366
      %778 = vmatpush1.msra.mxu0 %v365
      %779 = vmatprep.subr.mxu0 0.0
      %780 = vmatpush2.msra.mxu0 0.0
      %781 = vmatprep.subr.mxu0 0.0
      %782 = vmatpush2.msra.mxu0 0.0
      %783 = vmatprep.subr.mxu0 0.0
      %784 = vmatpush2.msra.mxu0 0.0
      %785 = vmatprep.subr.mxu0 0.0
      %786 = vmatpush2.msra.mxu0 0.0
      %787 = vmatprep.subr.mxu0 0.0
      %788 = vmatpush2.msra.mxu0 0.0
      %789 = vmatprep.subr.mxu0 0.0
      %790 = vmatpush2.msra.mxu0 0.0
      %791 = vmatprep.subr.mxu0 0.0
      %792 = vmatpush2.msra.mxu0 0.0
      %793 = vmatprep.subr.mxu0 0.0
      %794 = vmatpush2.msra.mxu0 0.0
      %795 = vmatprep.subr.mxu0 0.0
      %796 = vmatpush2.msra.mxu0 0.0
      %797 = vmatprep.subr.mxu0 0.0
      %798 = vmatpush2.msra.mxu0 0.0
      %799 = vmatprep.subr.mxu0 0.0
      %800 = vmatpush2.msra.mxu0 0.0
      %801 = vmatprep.subr.mxu0 0.0
      %802 = vmatpush2.msra.mxu0 0.0
      %803 = vmatprep.subr.mxu0 0.0
      %804 = vmatpush2.msra.mxu0 0.0
      %805 = vmatprep.subr.mxu0 0.0
      %806 = vmatpush2.msra.mxu0 0.0
      %807 = vmatprep.subr.mxu0 0.0
      %808 = vmatpush2.msra.mxu0 0.0
      %809 = vmatprep.subr.mxu0 0.0
      %810 = vmatpush2.msra.mxu0 0.0
      %811 = vmatprep.mubr.f32.mxu0 0.0
      %812 = vmatmul.mubr.f32.gmra.mxu0 %v395
      %v813 = vpop.f32.mrf.mxu0
      %v814 = vadd.f32 %v384, %v813
      %v815 = vpop.f32.mrf.mxu0
      %v816 = vadd.f32 %v388, %v815
      %817 = vmatprep.mubr.f32.mxu0 0.0
      %818 = vmatmul.mubr.f32.gmra.mxu0 %v398
      %v819 = vpop.f32.mrf.mxu0
      %v820 = vadd.f32 %v384, %v819
      %v821 = vpop.f32.mrf.mxu0
      %v822 = vadd.f32 %v388, %v821
      %823 = vmatprep.mubr.f32.mxu0 0.0
      %824 = vmatmul.mubr.f32.gmra.mxu0 %v401
      %v825 = vpop.f32.mrf.mxu0
      %v826 = vadd.f32 %v384, %v825
      %v827 = vpop.f32.mrf.mxu0
      %v828 = vadd.f32 %v388, %v827
      %829 = vmatprep.mubr.f32.mxu0 0.0
      %830 = vmatmul.mubr.f32.gmra.mxu0 %v404
      %v831 = vpop.f32.mrf.mxu0
      %v832 = vadd.f32 %v384, %v831
      %v833 = vpop.f32.mrf.mxu0
      %v834 = vadd.f32 %v388, %v833
      %835 = vmatprep.mubr.f32.mxu0 0.0
      %836 = vmatmul.mubr.f32.gmra.mxu0 %v407
      %v837 = vpop.f32.mrf.mxu0
      %v838 = vadd.f32 %v384, %v837
      %v839 = vpop.f32.mrf.mxu0
      %v840 = vadd.f32 %v388, %v839
      %841 = vmatprep.mubr.f32.mxu0 0.0
      %842 = vmatmul.mubr.f32.gmra.mxu0 %v410
      %v843 = vpop.f32.mrf.mxu0
      %v844 = vadd.f32 %v384, %v843
      %v845 = vpop.f32.mrf.mxu0
      %v846 = vadd.f32 %v388, %v845
      %847 = vmatprep.mubr.f32.mxu0 0.0
      %848 = vmatmul.mubr.f32.gmra.mxu0 %v413
      %v849 = vpop.f32.mrf.mxu0
      %v850 = vadd.f32 %v384, %v849
      %v851 = vpop.f32.mrf.mxu0
      %v852 = vadd.f32 %v388, %v851
      %853 = vmatprep.mubr.f32.mxu0 0.0
      %854 = vmatmul.mubr.f32.gmra.mxu0 %v416
      %v855 = vpop.f32.mrf.mxu0
      %v856 = vadd.f32 %v384, %v855
      %v857 = vpop.f32.mrf.mxu0
      %v858 = vadd.f32 %v388, %v857
      %859 = vmatprep.mubr.f32.mxu0 0.0
      %860 = vmatmul.mubr.f32.gmra.mxu0 %v419
      %v861 = vpop.f32.mrf.mxu0
      %v862 = vadd.f32 %v384, %v861
      %v863 = vpop.f32.mrf.mxu0
      %v864 = vadd.f32 %v388, %v863
      %865 = vmatprep.mubr.f32.mxu0 0.0
      %866 = vmatmul.mubr.f32.gmra.mxu0 %v422
      %v867 = vpop.f32.mrf.mxu0
      %v868 = vadd.f32 %v384, %v867
      %v869 = vpop.f32.mrf.mxu0
      %v870 = vadd.f32 %v388, %v869
      %871 = vmatprep.mubr.f32.mxu0 0.0
      %872 = vmatmul.mubr.f32.gmra.mxu0 %v425
      %v873 = vpop.f32.mrf.mxu0
      %v874 = vadd.f32 %v384, %v873
      %v875 = vpop.f32.mrf.mxu0
      %v876 = vadd.f32 %v388, %v875
      %877 = vmatprep.mubr.f32.mxu0 0.0
      %878 = vmatmul.mubr.f32.gmra.mxu0 %v428
      %v879 = vpop.f32.mrf.mxu0
      %v880 = vadd.f32 %v384, %v879
      %v881 = vpop.f32.mrf.mxu0
      %v882 = vadd.f32 %v388, %v881
      %883 = vmatprep.mubr.f32.mxu0 0.0
      %884 = vmatmul.mubr.f32.gmra.mxu0 %v431
      %v885 = vpop.f32.mrf.mxu0
      %v886 = vadd.f32 %v384, %v885
      %v887 = vpop.f32.mrf.mxu0
      %v888 = vadd.f32 %v388, %v887
      %889 = vmatprep.mubr.f32.mxu0 0.0
      %890 = vmatmul.mubr.f32.gmra.mxu0 %v434
      %v891 = vpop.f32.mrf.mxu0
      %v892 = vadd.f32 %v384, %v891
      %v893 = vpop.f32.mrf.mxu0
      %v894 = vadd.f32 %v388, %v893
      %895 = vmatprep.mubr.f32.mxu0 0.0
      %896 = vmatmul.mubr.f32.gmra.mxu0 %v437
      %v897 = vpop.f32.mrf.mxu0
      %v898 = vadd.f32 %v384, %v897
      %v899 = vpop.f32.mrf.mxu0
      %v900 = vadd.f32 %v388, %v899
      %901 = vmatprep.mubr.f32.mxu0 0.0
      %902 = vmatmul.mubr.f32.gmra.mxu0 %v440
      %v903 = vpop.f32.mrf.mxu0
      %v904 = vadd.f32 %v384, %v903
      %v905 = vpop.f32.mrf.mxu0
      %v906 = vadd.f32 %v388, %v905
      %907 = vmatprep.mubr.f32.mxu0 0.0
      %908 = vmatmul.mubr.f32.gmra.mxu0 %v443
      %v909 = vpop.f32.mrf.mxu0
      %v910 = vadd.f32 %v384, %v909
      %v911 = vpop.f32.mrf.mxu0
      %v912 = vadd.f32 %v388, %v911
      %913 = vmatprep.mubr.f32.mxu0 0.0
      %914 = vmatmul.mubr.f32.gmra.mxu0 %v446
      %v915 = vpop.f32.mrf.mxu0
      %v916 = vadd.f32 %v384, %v915
      %v917 = vpop.f32.mrf.mxu0
      %v918 = vadd.f32 %v388, %v917
      %919 = vmatprep.mubr.f32.mxu0 0.0
      %920 = vmatmul.mubr.f32.gmra.mxu0 %v449
      %v921 = vpop.f32.mrf.mxu0
      %v922 = vadd.f32 %v384, %v921
      %v923 = vpop.f32.mrf.mxu0
      %v924 = vadd.f32 %v388, %v923
      %925 = vmatprep.mubr.f32.mxu0 0.0
      %926 = vmatmul.mubr.f32.gmra.mxu0 %v452
      %v927 = vpop.f32.mrf.mxu0
      %v928 = vadd.f32 %v384, %v927
      %v929 = vpop.f32.mrf.mxu0
      %v930 = vadd.f32 %v388, %v929
      %931 = vmatprep.mubr.f32.mxu0 0.0
      %932 = vmatmul.mubr.f32.gmra.mxu0 %v455
      %v933 = vpop.f32.mrf.mxu0
      %v934 = vadd.f32 %v384, %v933
      %v935 = vpop.f32.mrf.mxu0
      %v936 = vadd.f32 %v388, %v935
      %937 = vmatprep.mubr.f32.mxu0 0.0
      %938 = vmatmul.mubr.f32.gmra.mxu0 %v458
      %v939 = vpop.f32.mrf.mxu0
      %v940 = vadd.f32 %v384, %v939
      %v941 = vpop.f32.mrf.mxu0
      %v942 = vadd.f32 %v388, %v941
      %943 = vmatprep.mubr.f32.mxu0 0.0
      %944 = vmatmul.mubr.f32.gmra.mxu0 %v461
      %v945 = vpop.f32.mrf.mxu0
      %v946 = vadd.f32 %v384, %v945
      %v947 = vpop.f32.mrf.mxu0
      %v948 = vadd.f32 %v388, %v947
      %949 = vmatprep.mubr.f32.mxu0 0.0
      %950 = vmatmul.mubr.f32.gmra.mxu0 %v464
      %v951 = vpop.f32.mrf.mxu0
      %v952 = vadd.f32 %v384, %v951
      %v953 = vpop.f32.mrf.mxu0
      %v954 = vadd.f32 %v388, %v953
      %955 = vmatprep.mubr.f32.mxu0 0.0
      %956 = vmatmul.mubr.f32.gmra.mxu0 %v467
      %v957 = vpop.f32.mrf.mxu0
      %v958 = vadd.f32 %v384, %v957
      %v959 = vpop.f32.mrf.mxu0
      %v960 = vadd.f32 %v388, %v959
      %961 = vmatprep.mubr.f32.mxu0 0.0
      %962 = vmatmul.mubr.f32.gmra.mxu0 %v470
      %v963 = vpop.f32.mrf.mxu0
      %v964 = vadd.f32 %v384, %v963
      %v965 = vpop.f32.mrf.mxu0
      %v966 = vadd.f32 %v388, %v965
      %967 = vmatprep.mubr.f32.mxu0 0.0
      %968 = vmatmul.mubr.f32.gmra.mxu0 %v473
      %v969 = vpop.f32.mrf.mxu0
      %v970 = vadd.f32 %v384, %v969
      %v971 = vpop.f32.mrf.mxu0
      %v972 = vadd.f32 %v388, %v971
      %973 = vmatprep.mubr.f32.mxu0 0.0
      %974 = vmatmul.mubr.f32.gmra.mxu0 %v476
      %v975 = vpop.f32.mrf.mxu0
      %v976 = vadd.f32 %v384, %v975
      %v977 = vpop.f32.mrf.mxu0
      %v978 = vadd.f32 %v388, %v977
      %979 = vmatprep.mubr.f32.mxu0 0.0
      %980 = vmatmul.mubr.f32.gmra.mxu0 %v479
      %v981 = vpop.f32.mrf.mxu0
      %v982 = vadd.f32 %v384, %v981
      %v983 = vpop.f32.mrf.mxu0
      %v984 = vadd.f32 %v388, %v983
      %985 = vmatprep.mubr.f32.mxu0 0.0
      %986 = vmatmul.mubr.f32.gmra.mxu0 %v482
      %v987 = vpop.f32.mrf.mxu0
      %v988 = vadd.f32 %v384, %v987
      %v989 = vpop.f32.mrf.mxu0
      %v990 = vadd.f32 %v388, %v989
      %991 = vmatprep.mubr.f32.mxu0 0.0
      %992 = vmatmul.mubr.f32.gmra.mxu0 %v485
      %v993 = vpop.f32.mrf.mxu0
      %v994 = vadd.f32 %v384, %v993
      %v995 = vpop.f32.mrf.mxu0
      %v996 = vadd.f32 %v388, %v995
      %997 = vmatprep.mubr.f32.mxu0 0.0
      %998 = vmatmul.mubr.f32.gmra.mxu0 %v488
      %v999 = vpop.f32.mrf.mxu0
      %v1000 = vadd.f32 %v384, %v999
      %v1001 = vpop.f32.mrf.mxu0
      %v1002 = vadd.f32 %v388, %v1001
      %1003 = vdwg.mxu0
      %v1004 = vld [vmem:[%s323] sm:$0xff]
      %v1005 = vld [vmem:[%s323 + $0x8] sm:$0xff]
      %v1006 = vld [vmem:[%s323 + $0x10] sm:$0xff]
      %v1007 = vld [vmem:[%s323 + $0x18] sm:$0xff]
      %v1008 = vld [vmem:[%s323 + $0x20] sm:$0xff]
      %v1009 = vld [vmem:[%s323 + $0x28] sm:$0xff]
      %v1010 = vld [vmem:[%s323 + $0x30] sm:$0xff]
      %v1011 = vld [vmem:[%s323 + $0x38] sm:$0xff]
      %v1012 = vld [vmem:[%s323 + $0x40] sm:$0xff]
      %v1013 = vld [vmem:[%s323 + $0x48] sm:$0xff]
      %v1014 = vld [vmem:[%s323 + $0x50] sm:$0xff]
      %v1015 = vld [vmem:[%s323 + $0x58] sm:$0xff]
      %v1016 = vld [vmem:[%s323 + $0x60] sm:$0xff]
      %v1017 = vld [vmem:[%s323 + $0x68] sm:$0xff]
      %v1018 = vld [vmem:[%s323 + $0x70] sm:$0xff]
      %v1019 = vld [vmem:[%s323 + $0x78] sm:$0xff]
      %v1020 = vld [vmem:[%s323 + $0x80] sm:$0xff]
      %v1021 = vld [vmem:[%s323 + $0x88] sm:$0xff]
      %v1022 = vld [vmem:[%s323 + $0x90] sm:$0xff]
      %v1023 = vld [vmem:[%s323 + $0x98] sm:$0xff]
      %v1024 = vld [vmem:[%s323 + $0xa0] sm:$0xff]
      %v1025 = vld [vmem:[%s323 + $0xa8] sm:$0xff]
      %v1026 = vld [vmem:[%s323 + $0xb0] sm:$0xff]
      %v1027 = vld [vmem:[%s323 + $0xb8] sm:$0xff]
      %v1028 = vld [vmem:[%s323 + $0xc0] sm:$0xff]
      %v1029 = vld [vmem:[%s323 + $0xc8] sm:$0xff]
      %v1030 = vld [vmem:[%s323 + $0xd0] sm:$0xff]
      %v1031 = vld [vmem:[%s323 + $0xd8] sm:$0xff]
      %v1032 = vld [vmem:[%s323 + $0xe0] sm:$0xff]
      %v1033 = vld [vmem:[%s323 + $0xe8] sm:$0xff]
      %v1034 = vld [vmem:[%s323 + $0xf0] sm:$0xff]
      %v1035 = vld [vmem:[%s323 + $0xf8] sm:$0xff]
      %v1036 = vld [vmem:[%s4] sm:$0xff]
      %v1037 = vld [vmem:[%s4 + $0x8] sm:$0xff]
      %v1038 = vld [vmem:[%s4 + $0x10] sm:$0xff]
      %v1039 = vld [vmem:[%s4 + $0x18] sm:$0xff]
      %v1040 = vld [vmem:[%s4 + $0x20] sm:$0xff]
      %v1041 = vld [vmem:[%s4 + $0x28] sm:$0xff]
      %v1042 = vld [vmem:[%s4 + $0x30] sm:$0xff]
      %v1043 = vld [vmem:[%s4 + $0x38] sm:$0xff]
      %v1044 = vld [vmem:[%s4 + $0x40] sm:$0xff]
      %v1045 = vld [vmem:[%s4 + $0x48] sm:$0xff]
      %v1046 = vld [vmem:[%s4 + $0x50] sm:$0xff]
      %v1047 = vld [vmem:[%s4 + $0x58] sm:$0xff]
      %v1048 = vld [vmem:[%s5] sm:$0xf]
      %v1050 = vlaneseq
      %v1051 = vshrl.u32 %v1050, 7
      %v1052 = vsub.s32 0, %v1051
      %v1053 = vrot.slane %v1048, %v1052
      %v1054 = vlaneseq
      %v1055 = vshrl.u32 %v1054, 7
      %v1056 = vsub.s32 1, %v1055
      %v1057 = vrot.slane %v1048, %v1056
      %v1058 = vlaneseq
      %v1059 = vshrl.u32 %v1058, 7
      %v1060 = vsub.s32 2, %v1059
      %v1061 = vrot.slane %v1048, %v1060
      %v1062 = vlaneseq
      %v1063 = vshrl.u32 %v1062, 7
      %v1064 = vsub.s32 3, %v1063
      %v1065 = vrot.slane %v1048, %v1064
      %vm1070 = vcmask 195584
      %v1072 = vsel %vm1070, %v1004, 0
      %v1075 = vsel %vm1070, %v1005, 0
      %v1078 = vsel %vm1070, %v1006, 0
      %v1081 = vsel %vm1070, %v1007, 0
      %v1084 = vsel %vm1070, %v1008, 0
      %v1087 = vsel %vm1070, %v1009, 0
      %v1090 = vsel %vm1070, %v1010, 0
      %v1093 = vsel %vm1070, %v1011, 0
      %v1096 = vsel %vm1070, %v1012, 0
      %v1099 = vsel %vm1070, %v1013, 0
      %v1102 = vsel %vm1070, %v1014, 0
      %v1105 = vsel %vm1070, %v1015, 0
      %v1108 = vsel %vm1070, %v1016, 0
      %v1111 = vsel %vm1070, %v1017, 0
      %v1114 = vsel %vm1070, %v1018, 0
      %v1117 = vsel %vm1070, %v1019, 0
      %v1120 = vsel %vm1070, %v1020, 0
      %v1123 = vsel %vm1070, %v1021, 0
      %v1126 = vsel %vm1070, %v1022, 0
      %v1129 = vsel %vm1070, %v1023, 0
      %v1132 = vsel %vm1070, %v1024, 0
      %v1135 = vsel %vm1070, %v1025, 0
      %v1138 = vsel %vm1070, %v1026, 0
      %v1141 = vsel %vm1070, %v1027, 0
      %v1144 = vsel %vm1070, %v1028, 0
      %v1147 = vsel %vm1070, %v1029, 0
      %v1150 = vsel %vm1070, %v1030, 0
      %v1153 = vsel %vm1070, %v1031, 0
      %v1156 = vsel %vm1070, %v1032, 0
      %v1159 = vsel %vm1070, %v1033, 0
      %v1162 = vsel %vm1070, %v1034, 0
      %v1165 = vsel %vm1070, %v1035, 0
      %1167 = vmatprep.subr.mxu0 0.0
      %1168 = vmatpush1.msra.mxu0 0.0
      %1169 = vmatprep.subr.mxu0 0.0
      %1170 = vmatpush1.msra.mxu0 0.0
      %1171 = vmatprep.subr.mxu0 0.0
      %1172 = vmatpush1.msra.mxu0 0.0
      %1173 = vmatprep.subr.mxu0 0.0
      %1174 = vmatpush1.msra.mxu0 0.0
      %1175 = vmatprep.subr.mxu0 0.0
      %1176 = vmatpush1.msra.mxu0 0.0
      %1177 = vmatprep.subr.mxu0 0.0
      %1178 = vmatpush1.msra.mxu0 0.0
      %1179 = vmatprep.subr.mxu0 0.0
      %1180 = vmatpush1.msra.mxu0 0.0
      %1181 = vmatprep.subr.mxu0 0.0
      %1182 = vmatpush1.msra.mxu0 0.0
      %1183 = vmatprep.subr.mxu0 0.0
      %1184 = vmatpush1.msra.mxu0 0.0
      %1185 = vmatprep.subr.mxu0 0.0
      %1186 = vmatpush1.msra.mxu0 0.0
      %1187 = vmatprep.subr.mxu0 0.0
      %1188 = vmatpush1.msra.mxu0 0.0
      %1189 = vmatprep.subr.mxu0 0.0
      %1190 = vmatpush1.msra.mxu0 0.0
      %1191 = vmatprep.subr.mxu0 0.0
      %1192 = vmatpush1.msra.mxu0 0.0
      %1193 = vmatprep.subr.mxu0 %v1045
      %1194 = vmatpush1.msra.mxu0 %v1044
      %1195 = vmatprep.subr.mxu0 %v1041
      %1196 = vmatpush1.msra.mxu0 %v1040
      %1197 = vmatprep.subr.mxu0 %v1037
      %1198 = vmatpush1.msra.mxu0 %v1036
      %1199 = vmatprep.subr.mxu0 0.0
      %1200 = vmatpush2.msra.mxu0 0.0
      %1201 = vmatprep.subr.mxu0 0.0
      %1202 = vmatpush2.msra.mxu0 0.0
      %1203 = vmatprep.subr.mxu0 0.0
      %1204 = vmatpush2.msra.mxu0 0.0
      %1205 = vmatprep.subr.mxu0 0.0
      %1206 = vmatpush2.msra.mxu0 0.0
      %1207 = vmatprep.subr.mxu0 0.0
      %1208 = vmatpush2.msra.mxu0 0.0
      %1209 = vmatprep.subr.mxu0 0.0
      %1210 = vmatpush2.msra.mxu0 0.0
      %1211 = vmatprep.subr.mxu0 0.0
      %1212 = vmatpush2.msra.mxu0 0.0
      %1213 = vmatprep.subr.mxu0 0.0
      %1214 = vmatpush2.msra.mxu0 0.0
      %1215 = vmatprep.subr.mxu0 0.0
      %1216 = vmatpush2.msra.mxu0 0.0
      %1217 = vmatprep.subr.mxu0 0.0
      %1218 = vmatpush2.msra.mxu0 0.0
      %1219 = vmatprep.subr.mxu0 0.0
      %1220 = vmatpush2.msra.mxu0 0.0
      %1221 = vmatprep.subr.mxu0 0.0
      %1222 = vmatpush2.msra.mxu0 0.0
      %1223 = vmatprep.subr.mxu0 0.0
      %1224 = vmatpush2.msra.mxu0 0.0
      %1225 = vmatprep.subr.mxu0 0.0
      %1226 = vmatpush2.msra.mxu0 0.0
      %1227 = vmatprep.subr.mxu0 0.0
      %1228 = vmatpush2.msra.mxu0 0.0
      %1229 = vmatprep.subr.mxu0 0.0
      %1230 = vmatpush2.msra.mxu0 0.0
      %1231 = vmatprep.mubr.f32.mxu0 0.0
      %1232 = vmatmul.mubr.f32.gmra.mxu0 %v1072
      %v1233 = vpop.f32.mrf.mxu0
      %v1234 = vadd.f32 %v1053, %v1233
      %v1235 = vpop.f32.mrf.mxu0
      %v1236 = vadd.f32 %v1057, %v1235
      %1237 = vmatprep.mubr.f32.mxu0 0.0
      %1238 = vmatmul.mubr.f32.gmra.mxu0 %v1075
      %v1239 = vpop.f32.mrf.mxu0
      %v1240 = vadd.f32 %v1053, %v1239
      %v1241 = vpop.f32.mrf.mxu0
      %v1242 = vadd.f32 %v1057, %v1241
      %1243 = vmatprep.mubr.f32.mxu0 0.0
      %1244 = vmatmul.mubr.f32.gmra.mxu0 %v1078
      %v1245 = vpop.f32.mrf.mxu0
      %v1246 = vadd.f32 %v1053, %v1245
      %v1247 = vpop.f32.mrf.mxu0
      %v1248 = vadd.f32 %v1057, %v1247
      %1249 = vmatprep.mubr.f32.mxu0 0.0
      %1250 = vmatmul.mubr.f32.gmra.mxu0 %v1081
      %v1251 = vpop.f32.mrf.mxu0
      %v1252 = vadd.f32 %v1053, %v1251
      %v1253 = vpop.f32.mrf.mxu0
      %v1254 = vadd.f32 %v1057, %v1253
      %1255 = vmatprep.mubr.f32.mxu0 0.0
      %1256 = vmatmul.mubr.f32.gmra.mxu0 %v1084
      %v1257 = vpop.f32.mrf.mxu0
      %v1258 = vadd.f32 %v1053, %v1257
      %v1259 = vpop.f32.mrf.mxu0
      %v1260 = vadd.f32 %v1057, %v1259
      %1261 = vmatprep.mubr.f32.mxu0 0.0
      %1262 = vmatmul.mubr.f32.gmra.mxu0 %v1087
      %v1263 = vpop.f32.mrf.mxu0
      %v1264 = vadd.f32 %v1053, %v1263
      %v1265 = vpop.f32.mrf.mxu0
      %v1266 = vadd.f32 %v1057, %v1265
      %1267 = vmatprep.mubr.f32.mxu0 0.0
      %1268 = vmatmul.mubr.f32.gmra.mxu0 %v1090
      %v1269 = vpop.f32.mrf.mxu0
      %v1270 = vadd.f32 %v1053, %v1269
      %v1271 = vpop.f32.mrf.mxu0
      %v1272 = vadd.f32 %v1057, %v1271
      %1273 = vmatprep.mubr.f32.mxu0 0.0
      %1274 = vmatmul.mubr.f32.gmra.mxu0 %v1093
      %v1275 = vpop.f32.mrf.mxu0
      %v1276 = vadd.f32 %v1053, %v1275
      %v1277 = vpop.f32.mrf.mxu0
      %v1278 = vadd.f32 %v1057, %v1277
      %1279 = vmatprep.mubr.f32.mxu0 0.0
      %1280 = vmatmul.mubr.f32.gmra.mxu0 %v1096
      %v1281 = vpop.f32.mrf.mxu0
      %v1282 = vadd.f32 %v1053, %v1281
      %v1283 = vpop.f32.mrf.mxu0
      %v1284 = vadd.f32 %v1057, %v1283
      %1285 = vmatprep.mubr.f32.mxu0 0.0
      %1286 = vmatmul.mubr.f32.gmra.mxu0 %v1099
      %v1287 = vpop.f32.mrf.mxu0
      %v1288 = vadd.f32 %v1053, %v1287
      %v1289 = vpop.f32.mrf.mxu0
      %v1290 = vadd.f32 %v1057, %v1289
      %1291 = vmatprep.mubr.f32.mxu0 0.0
      %1292 = vmatmul.mubr.f32.gmra.mxu0 %v1102
      %v1293 = vpop.f32.mrf.mxu0
      %v1294 = vadd.f32 %v1053, %v1293
      %v1295 = vpop.f32.mrf.mxu0
      %v1296 = vadd.f32 %v1057, %v1295
      %1297 = vmatprep.mubr.f32.mxu0 0.0
      %1298 = vmatmul.mubr.f32.gmra.mxu0 %v1105
      %v1299 = vpop.f32.mrf.mxu0
      %v1300 = vadd.f32 %v1053, %v1299
      %v1301 = vpop.f32.mrf.mxu0
      %v1302 = vadd.f32 %v1057, %v1301
      %1303 = vmatprep.mubr.f32.mxu0 0.0
      %1304 = vmatmul.mubr.f32.gmra.mxu0 %v1108
      %v1305 = vpop.f32.mrf.mxu0
      %v1306 = vadd.f32 %v1053, %v1305
      %v1307 = vpop.f32.mrf.mxu0
      %v1308 = vadd.f32 %v1057, %v1307
      %1309 = vmatprep.mubr.f32.mxu0 0.0
      %1310 = vmatmul.mubr.f32.gmra.mxu0 %v1111
      %v1311 = vpop.f32.mrf.mxu0
      %v1312 = vadd.f32 %v1053, %v1311
      %v1313 = vpop.f32.mrf.mxu0
      %v1314 = vadd.f32 %v1057, %v1313
      %1315 = vmatprep.mubr.f32.mxu0 0.0
      %1316 = vmatmul.mubr.f32.gmra.mxu0 %v1114
      %v1317 = vpop.f32.mrf.mxu0
      %v1318 = vadd.f32 %v1053, %v1317
      %v1319 = vpop.f32.mrf.mxu0
      %v1320 = vadd.f32 %v1057, %v1319
      %1321 = vmatprep.mubr.f32.mxu0 0.0
      %1322 = vmatmul.mubr.f32.gmra.mxu0 %v1117
      %v1323 = vpop.f32.mrf.mxu0
      %v1324 = vadd.f32 %v1053, %v1323
      %v1325 = vpop.f32.mrf.mxu0
      %v1326 = vadd.f32 %v1057, %v1325
      %1327 = vmatprep.mubr.f32.mxu0 0.0
      %1328 = vmatmul.mubr.f32.gmra.mxu0 %v1120
      %v1329 = vpop.f32.mrf.mxu0
      %v1330 = vadd.f32 %v1053, %v1329
      %v1331 = vpop.f32.mrf.mxu0
      %v1332 = vadd.f32 %v1057, %v1331
      %1333 = vmatprep.mubr.f32.mxu0 0.0
      %1334 = vmatmul.mubr.f32.gmra.mxu0 %v1123
      %v1335 = vpop.f32.mrf.mxu0
      %v1336 = vadd.f32 %v1053, %v1335
      %v1337 = vpop.f32.mrf.mxu0
      %v1338 = vadd.f32 %v1057, %v1337
      %1339 = vmatprep.mubr.f32.mxu0 0.0
      %1340 = vmatmul.mubr.f32.gmra.mxu0 %v1126
      %v1341 = vpop.f32.mrf.mxu0
      %v1342 = vadd.f32 %v1053, %v1341
      %v1343 = vpop.f32.mrf.mxu0
      %v1344 = vadd.f32 %v1057, %v1343
      %1345 = vmatprep.mubr.f32.mxu0 0.0
      %1346 = vmatmul.mubr.f32.gmra.mxu0 %v1129
      %v1347 = vpop.f32.mrf.mxu0
      %v1348 = vadd.f32 %v1053, %v1347
      %v1349 = vpop.f32.mrf.mxu0
      %v1350 = vadd.f32 %v1057, %v1349
      %1351 = vmatprep.mubr.f32.mxu0 0.0
      %1352 = vmatmul.mubr.f32.gmra.mxu0 %v1132
      %v1353 = vpop.f32.mrf.mxu0
      %v1354 = vadd.f32 %v1053, %v1353
      %v1355 = vpop.f32.mrf.mxu0
      %v1356 = vadd.f32 %v1057, %v1355
      %1357 = vmatprep.mubr.f32.mxu0 0.0
      %1358 = vmatmul.mubr.f32.gmra.mxu0 %v1135
      %v1359 = vpop.f32.mrf.mxu0
      %v1360 = vadd.f32 %v1053, %v1359
      %v1361 = vpop.f32.mrf.mxu0
      %v1362 = vadd.f32 %v1057, %v1361
      %1363 = vmatprep.mubr.f32.mxu0 0.0
      %1364 = vmatmul.mubr.f32.gmra.mxu0 %v1138
      %v1365 = vpop.f32.mrf.mxu0
      %v1366 = vadd.f32 %v1053, %v1365
      %v1367 = vpop.f32.mrf.mxu0
      %v1368 = vadd.f32 %v1057, %v1367
      %1369 = vmatprep.mubr.f32.mxu0 0.0
      %1370 = vmatmul.mubr.f32.gmra.mxu0 %v1141
      %v1371 = vpop.f32.mrf.mxu0
      %v1372 = vadd.f32 %v1053, %v1371
      %v1373 = vpop.f32.mrf.mxu0
      %v1374 = vadd.f32 %v1057, %v1373
      %1375 = vmatprep.mubr.f32.mxu0 0.0
      %1376 = vmatmul.mubr.f32.gmra.mxu0 %v1144
      %v1377 = vpop.f32.mrf.mxu0
      %v1378 = vadd.f32 %v1053, %v1377
      %v1379 = vpop.f32.mrf.mxu0
      %v1380 = vadd.f32 %v1057, %v1379
      %1381 = vmatprep.mubr.f32.mxu0 0.0
      %1382 = vmatmul.mubr.f32.gmra.mxu0 %v1147
      %v1383 = vpop.f32.mrf.mxu0
      %v1384 = vadd.f32 %v1053, %v1383
      %v1385 = vpop.f32.mrf.mxu0
      %v1386 = vadd.f32 %v1057, %v1385
      %1387 = vmatprep.mubr.f32.mxu0 0.0
      %1388 = vmatmul.mubr.f32.gmra.mxu0 %v1150
      %v1389 = vpop.f32.mrf.mxu0
      %v1390 = vadd.f32 %v1053, %v1389
      %v1391 = vpop.f32.mrf.mxu0
      %v1392 = vadd.f32 %v1057, %v1391
      %1393 = vmatprep.mubr.f32.mxu0 0.0
      %1394 = vmatmul.mubr.f32.gmra.mxu0 %v1153
      %v1395 = vpop.f32.mrf.mxu0
      %v1396 = vadd.f32 %v1053, %v1395
      %v1397 = vpop.f32.mrf.mxu0
      %v1398 = vadd.f32 %v1057, %v1397
      %1399 = vmatprep.mubr.f32.mxu0 0.0
      %1400 = vmatmul.mubr.f32.gmra.mxu0 %v1156
      %v1401 = vpop.f32.mrf.mxu0
      %v1402 = vadd.f32 %v1053, %v1401
      %v1403 = vpop.f32.mrf.mxu0
      %v1404 = vadd.f32 %v1057, %v1403
      %1405 = vmatprep.mubr.f32.mxu0 0.0
      %1406 = vmatmul.mubr.f32.gmra.mxu0 %v1159
      %v1407 = vpop.f32.mrf.mxu0
      %v1408 = vadd.f32 %v1053, %v1407
      %v1409 = vpop.f32.mrf.mxu0
      %v1410 = vadd.f32 %v1057, %v1409
      %1411 = vmatprep.mubr.f32.mxu0 0.0
      %1412 = vmatmul.mubr.f32.gmra.mxu0 %v1162
      %v1413 = vpop.f32.mrf.mxu0
      %v1414 = vadd.f32 %v1053, %v1413
      %v1415 = vpop.f32.mrf.mxu0
      %v1416 = vadd.f32 %v1057, %v1415
      %1417 = vmatprep.mubr.f32.mxu0 0.0
      %1418 = vmatmul.mubr.f32.gmra.mxu0 %v1165
      %v1419 = vpop.f32.mrf.mxu0
      %v1420 = vadd.f32 %v1053, %v1419
      %v1421 = vpop.f32.mrf.mxu0
      %v1422 = vadd.f32 %v1057, %v1421
      %1423 = vdwg.mxu0
      %1424 = vmatprep.subr.mxu0 0.0
      %1425 = vmatpush1.msra.mxu0 0.0
      %1426 = vmatprep.subr.mxu0 0.0
      %1427 = vmatpush1.msra.mxu0 0.0
      %1428 = vmatprep.subr.mxu0 0.0
      %1429 = vmatpush1.msra.mxu0 0.0
      %1430 = vmatprep.subr.mxu0 0.0
      %1431 = vmatpush1.msra.mxu0 0.0
      %1432 = vmatprep.subr.mxu0 0.0
      %1433 = vmatpush1.msra.mxu0 0.0
      %1434 = vmatprep.subr.mxu0 0.0
      %1435 = vmatpush1.msra.mxu0 0.0
      %1436 = vmatprep.subr.mxu0 0.0
      %1437 = vmatpush1.msra.mxu0 0.0
      %1438 = vmatprep.subr.mxu0 0.0
      %1439 = vmatpush1.msra.mxu0 0.0
      %1440 = vmatprep.subr.mxu0 0.0
      %1441 = vmatpush1.msra.mxu0 0.0
      %1442 = vmatprep.subr.mxu0 0.0
      %1443 = vmatpush1.msra.mxu0 0.0
      %1444 = vmatprep.subr.mxu0 0.0
      %1445 = vmatpush1.msra.mxu0 0.0
      %1446 = vmatprep.subr.mxu0 0.0
      %1447 = vmatpush1.msra.mxu0 0.0
      %1448 = vmatprep.subr.mxu0 0.0
      %1449 = vmatpush1.msra.mxu0 0.0
      %1450 = vmatprep.subr.mxu0 %v1047
      %1451 = vmatpush1.msra.mxu0 %v1046
      %1452 = vmatprep.subr.mxu0 %v1043
      %1453 = vmatpush1.msra.mxu0 %v1042
      %1454 = vmatprep.subr.mxu0 %v1039
      %1455 = vmatpush1.msra.mxu0 %v1038
      %1456 = vmatprep.subr.mxu0 0.0
      %1457 = vmatpush2.msra.mxu0 0.0
      %1458 = vmatprep.subr.mxu0 0.0
      %1459 = vmatpush2.msra.mxu0 0.0
      %1460 = vmatprep.subr.mxu0 0.0
      %1461 = vmatpush2.msra.mxu0 0.0
      %1462 = vmatprep.subr.mxu0 0.0
      %1463 = vmatpush2.msra.mxu0 0.0
      %1464 = vmatprep.subr.mxu0 0.0
      %1465 = vmatpush2.msra.mxu0 0.0
      %1466 = vmatprep.subr.mxu0 0.0
      %1467 = vmatpush2.msra.mxu0 0.0
      %1468 = vmatprep.subr.mxu0 0.0
      %1469 = vmatpush2.msra.mxu0 0.0
      %1470 = vmatprep.subr.mxu0 0.0
      %1471 = vmatpush2.msra.mxu0 0.0
      %1472 = vmatprep.subr.mxu0 0.0
      %1473 = vmatpush2.msra.mxu0 0.0
      %1474 = vmatprep.subr.mxu0 0.0
      %1475 = vmatpush2.msra.mxu0 0.0
      %1476 = vmatprep.subr.mxu0 0.0
      %1477 = vmatpush2.msra.mxu0 0.0
      %1478 = vmatprep.subr.mxu0 0.0
      %1479 = vmatpush2.msra.mxu0 0.0
      %1480 = vmatprep.subr.mxu0 0.0
      %1481 = vmatpush2.msra.mxu0 0.0
      %1482 = vmatprep.subr.mxu0 0.0
      %1483 = vmatpush2.msra.mxu0 0.0
      %1484 = vmatprep.subr.mxu0 0.0
      %1485 = vmatpush2.msra.mxu0 0.0
      %1486 = vmatprep.subr.mxu0 0.0
      %1487 = vmatpush2.msra.mxu0 0.0
      %1488 = vmatprep.mubr.f32.mxu0 0.0
      %1489 = vmatmul.mubr.f32.gmra.mxu0 %v1072
      %v1490 = vpop.f32.mrf.mxu0
      %v1491 = vadd.f32 %v1061, %v1490
      %v1492 = vpop.f32.mrf.mxu0
      %v1493 = vadd.f32 %v1065, %v1492
      %1494 = vmatprep.mubr.f32.mxu0 0.0
      %1495 = vmatmul.mubr.f32.gmra.mxu0 %v1075
      %v1496 = vpop.f32.mrf.mxu0
      %v1497 = vadd.f32 %v1061, %v1496
      %v1498 = vpop.f32.mrf.mxu0
      %v1499 = vadd.f32 %v1065, %v1498
      %1500 = vmatprep.mubr.f32.mxu0 0.0
      %1501 = vmatmul.mubr.f32.gmra.mxu0 %v1078
      %v1502 = vpop.f32.mrf.mxu0
      %v1503 = vadd.f32 %v1061, %v1502
      %v1504 = vpop.f32.mrf.mxu0
      %v1505 = vadd.f32 %v1065, %v1504
      %1506 = vmatprep.mubr.f32.mxu0 0.0
      %1507 = vmatmul.mubr.f32.gmra.mxu0 %v1081
      %v1508 = vpop.f32.mrf.mxu0
      %v1509 = vadd.f32 %v1061, %v1508
      %v1510 = vpop.f32.mrf.mxu0
      %v1511 = vadd.f32 %v1065, %v1510
      %1512 = vmatprep.mubr.f32.mxu0 0.0
      %1513 = vmatmul.mubr.f32.gmra.mxu0 %v1084
      %v1514 = vpop.f32.mrf.mxu0
      %v1515 = vadd.f32 %v1061, %v1514
      %v1516 = vpop.f32.mrf.mxu0
      %v1517 = vadd.f32 %v1065, %v1516
      %1518 = vmatprep.mubr.f32.mxu0 0.0
      %1519 = vmatmul.mubr.f32.gmra.mxu0 %v1087
      %v1520 = vpop.f32.mrf.mxu0
      %v1521 = vadd.f32 %v1061, %v1520
      %v1522 = vpop.f32.mrf.mxu0
      %v1523 = vadd.f32 %v1065, %v1522
      %1524 = vmatprep.mubr.f32.mxu0 0.0
      %1525 = vmatmul.mubr.f32.gmra.mxu0 %v1090
      %v1526 = vpop.f32.mrf.mxu0
      %v1527 = vadd.f32 %v1061, %v1526
      %v1528 = vpop.f32.mrf.mxu0
      %v1529 = vadd.f32 %v1065, %v1528
      %1530 = vmatprep.mubr.f32.mxu0 0.0
      %1531 = vmatmul.mubr.f32.gmra.mxu0 %v1093
      %v1532 = vpop.f32.mrf.mxu0
      %v1533 = vadd.f32 %v1061, %v1532
      %v1534 = vpop.f32.mrf.mxu0
      %v1535 = vadd.f32 %v1065, %v1534
      %1536 = vmatprep.mubr.f32.mxu0 0.0
      %1537 = vmatmul.mubr.f32.gmra.mxu0 %v1096
      %v1538 = vpop.f32.mrf.mxu0
      %v1539 = vadd.f32 %v1061, %v1538
      %v1540 = vpop.f32.mrf.mxu0
      %v1541 = vadd.f32 %v1065, %v1540
      %1542 = vmatprep.mubr.f32.mxu0 0.0
      %1543 = vmatmul.mubr.f32.gmra.mxu0 %v1099
      %v1544 = vpop.f32.mrf.mxu0
      %v1545 = vadd.f32 %v1061, %v1544
      %v1546 = vpop.f32.mrf.mxu0
      %v1547 = vadd.f32 %v1065, %v1546
      %1548 = vmatprep.mubr.f32.mxu0 0.0
      %1549 = vmatmul.mubr.f32.gmra.mxu0 %v1102
      %v1550 = vpop.f32.mrf.mxu0
      %v1551 = vadd.f32 %v1061, %v1550
      %v1552 = vpop.f32.mrf.mxu0
      %v1553 = vadd.f32 %v1065, %v1552
      %1554 = vmatprep.mubr.f32.mxu0 0.0
      %1555 = vmatmul.mubr.f32.gmra.mxu0 %v1105
      %v1556 = vpop.f32.mrf.mxu0
      %v1557 = vadd.f32 %v1061, %v1556
      %v1558 = vpop.f32.mrf.mxu0
      %v1559 = vadd.f32 %v1065, %v1558
      %1560 = vmatprep.mubr.f32.mxu0 0.0
      %1561 = vmatmul.mubr.f32.gmra.mxu0 %v1108
      %v1562 = vpop.f32.mrf.mxu0
      %v1563 = vadd.f32 %v1061, %v1562
      %v1564 = vpop.f32.mrf.mxu0
      %v1565 = vadd.f32 %v1065, %v1564
      %1566 = vmatprep.mubr.f32.mxu0 0.0
      %1567 = vmatmul.mubr.f32.gmra.mxu0 %v1111
      %v1568 = vpop.f32.mrf.mxu0
      %v1569 = vadd.f32 %v1061, %v1568
      %v1570 = vpop.f32.mrf.mxu0
      %v1571 = vadd.f32 %v1065, %v1570
      %1572 = vmatprep.mubr.f32.mxu0 0.0
      %1573 = vmatmul.mubr.f32.gmra.mxu0 %v1114
      %v1574 = vpop.f32.mrf.mxu0
      %v1575 = vadd.f32 %v1061, %v1574
      %v1576 = vpop.f32.mrf.mxu0
      %v1577 = vadd.f32 %v1065, %v1576
      %1578 = vmatprep.mubr.f32.mxu0 0.0
      %1579 = vmatmul.mubr.f32.gmra.mxu0 %v1117
      %v1580 = vpop.f32.mrf.mxu0
      %v1581 = vadd.f32 %v1061, %v1580
      %v1582 = vpop.f32.mrf.mxu0
      %v1583 = vadd.f32 %v1065, %v1582
      %1584 = vmatprep.mubr.f32.mxu0 0.0
      %1585 = vmatmul.mubr.f32.gmra.mxu0 %v1120
      %v1586 = vpop.f32.mrf.mxu0
      %v1587 = vadd.f32 %v1061, %v1586
      %v1588 = vpop.f32.mrf.mxu0
      %v1589 = vadd.f32 %v1065, %v1588
      %1590 = vmatprep.mubr.f32.mxu0 0.0
      %1591 = vmatmul.mubr.f32.gmra.mxu0 %v1123
      %v1592 = vpop.f32.mrf.mxu0
      %v1593 = vadd.f32 %v1061, %v1592
      %v1594 = vpop.f32.mrf.mxu0
      %v1595 = vadd.f32 %v1065, %v1594
      %1596 = vmatprep.mubr.f32.mxu0 0.0
      %1597 = vmatmul.mubr.f32.gmra.mxu0 %v1126
      %v1598 = vpop.f32.mrf.mxu0
      %v1599 = vadd.f32 %v1061, %v1598
      %v1600 = vpop.f32.mrf.mxu0
      %v1601 = vadd.f32 %v1065, %v1600
      %1602 = vmatprep.mubr.f32.mxu0 0.0
      %1603 = vmatmul.mubr.f32.gmra.mxu0 %v1129
      %v1604 = vpop.f32.mrf.mxu0
      %v1605 = vadd.f32 %v1061, %v1604
      %v1606 = vpop.f32.mrf.mxu0
      %v1607 = vadd.f32 %v1065, %v1606
      %1608 = vmatprep.mubr.f32.mxu0 0.0
      %1609 = vmatmul.mubr.f32.gmra.mxu0 %v1132
      %v1610 = vpop.f32.mrf.mxu0
      %v1611 = vadd.f32 %v1061, %v1610
      %v1612 = vpop.f32.mrf.mxu0
      %v1613 = vadd.f32 %v1065, %v1612
      %1614 = vmatprep.mubr.f32.mxu0 0.0
      %1615 = vmatmul.mubr.f32.gmra.mxu0 %v1135
      %v1616 = vpop.f32.mrf.mxu0
      %v1617 = vadd.f32 %v1061, %v1616
      %v1618 = vpop.f32.mrf.mxu0
      %v1619 = vadd.f32 %v1065, %v1618
      %1620 = vmatprep.mubr.f32.mxu0 0.0
      %1621 = vmatmul.mubr.f32.gmra.mxu0 %v1138
      %v1622 = vpop.f32.mrf.mxu0
      %v1623 = vadd.f32 %v1061, %v1622
      %v1624 = vpop.f32.mrf.mxu0
      %v1625 = vadd.f32 %v1065, %v1624
      %1626 = vmatprep.mubr.f32.mxu0 0.0
      %1627 = vmatmul.mubr.f32.gmra.mxu0 %v1141
      %v1628 = vpop.f32.mrf.mxu0
      %v1629 = vadd.f32 %v1061, %v1628
      %v1630 = vpop.f32.mrf.mxu0
      %v1631 = vadd.f32 %v1065, %v1630
      %1632 = vmatprep.mubr.f32.mxu0 0.0
      %1633 = vmatmul.mubr.f32.gmra.mxu0 %v1144
      %v1634 = vpop.f32.mrf.mxu0
      %v1635 = vadd.f32 %v1061, %v1634
      %v1636 = vpop.f32.mrf.mxu0
      %v1637 = vadd.f32 %v1065, %v1636
      %1638 = vmatprep.mubr.f32.mxu0 0.0
      %1639 = vmatmul.mubr.f32.gmra.mxu0 %v1147
      %v1640 = vpop.f32.mrf.mxu0
      %v1641 = vadd.f32 %v1061, %v1640
      %v1642 = vpop.f32.mrf.mxu0
      %v1643 = vadd.f32 %v1065, %v1642
      %1644 = vmatprep.mubr.f32.mxu0 0.0
      %1645 = vmatmul.mubr.f32.gmra.mxu0 %v1150
      %v1646 = vpop.f32.mrf.mxu0
      %v1647 = vadd.f32 %v1061, %v1646
      %v1648 = vpop.f32.mrf.mxu0
      %v1649 = vadd.f32 %v1065, %v1648
      %1650 = vmatprep.mubr.f32.mxu0 0.0
      %1651 = vmatmul.mubr.f32.gmra.mxu0 %v1153
      %v1652 = vpop.f32.mrf.mxu0
      %v1653 = vadd.f32 %v1061, %v1652
      %v1654 = vpop.f32.mrf.mxu0
      %v1655 = vadd.f32 %v1065, %v1654
      %1656 = vmatprep.mubr.f32.mxu0 0.0
      %1657 = vmatmul.mubr.f32.gmra.mxu0 %v1156
      %v1658 = vpop.f32.mrf.mxu0
      %v1659 = vadd.f32 %v1061, %v1658
      %v1660 = vpop.f32.mrf.mxu0
      %v1661 = vadd.f32 %v1065, %v1660
      %1662 = vmatprep.mubr.f32.mxu0 0.0
      %1663 = vmatmul.mubr.f32.gmra.mxu0 %v1159
      %v1664 = vpop.f32.mrf.mxu0
      %v1665 = vadd.f32 %v1061, %v1664
      %v1666 = vpop.f32.mrf.mxu0
      %v1667 = vadd.f32 %v1065, %v1666
      %1668 = vmatprep.mubr.f32.mxu0 0.0
      %1669 = vmatmul.mubr.f32.gmra.mxu0 %v1162
      %v1670 = vpop.f32.mrf.mxu0
      %v1671 = vadd.f32 %v1061, %v1670
      %v1672 = vpop.f32.mrf.mxu0
      %v1673 = vadd.f32 %v1065, %v1672
      %1674 = vmatprep.mubr.f32.mxu0 0.0
      %1675 = vmatmul.mubr.f32.gmra.mxu0 %v1165
      %v1676 = vpop.f32.mrf.mxu0
      %v1677 = vadd.f32 %v1061, %v1676
      %v1678 = vpop.f32.mrf.mxu0
      %v1679 = vadd.f32 %v1065, %v1678
      %1680 = vdwg.mxu0
      %v1681 = vmul.f32 %v557, %v1234
      %v1682 = vmul.f32 %v559, %v1236
      %v1683 = vmul.f32 %v814, %v1491
      %v1684 = vmul.f32 %v816, %v1493
      %v1685 = vmul.f32 %v563, %v1240
      %v1686 = vmul.f32 %v565, %v1242
      %v1687 = vmul.f32 %v820, %v1497
      %v1688 = vmul.f32 %v822, %v1499
      %v1689 = vmul.f32 %v569, %v1246
      %v1690 = vmul.f32 %v571, %v1248
      %v1691 = vmul.f32 %v826, %v1503
      %v1692 = vmul.f32 %v828, %v1505
      %v1693 = vmul.f32 %v575, %v1252
      %v1694 = vmul.f32 %v577, %v1254
      %v1695 = vmul.f32 %v832, %v1509
      %v1696 = vmul.f32 %v834, %v1511
      %v1697 = vmul.f32 %v581, %v1258
      %v1698 = vmul.f32 %v583, %v1260
      %v1699 = vmul.f32 %v838, %v1515
      %v1700 = vmul.f32 %v840, %v1517
      %v1701 = vmul.f32 %v587, %v1264
      %v1702 = vmul.f32 %v589, %v1266
      %v1703 = vmul.f32 %v844, %v1521
      %v1704 = vmul.f32 %v846, %v1523
      %v1705 = vmul.f32 %v593, %v1270
      %v1706 = vmul.f32 %v595, %v1272
      %v1707 = vmul.f32 %v850, %v1527
      %v1708 = vmul.f32 %v852, %v1529
      %v1709 = vmul.f32 %v599, %v1276
      %v1710 = vmul.f32 %v601, %v1278
      %v1711 = vmul.f32 %v856, %v1533
      %v1712 = vmul.f32 %v858, %v1535
      %v1713 = vmul.f32 %v605, %v1282
      %v1714 = vmul.f32 %v607, %v1284
      %v1715 = vmul.f32 %v862, %v1539
      %v1716 = vmul.f32 %v864, %v1541
      %v1717 = vmul.f32 %v611, %v1288
      %v1718 = vmul.f32 %v613, %v1290
      %v1719 = vmul.f32 %v868, %v1545
      %v1720 = vmul.f32 %v870, %v1547
      %v1721 = vmul.f32 %v617, %v1294
      %v1722 = vmul.f32 %v619, %v1296
      %v1723 = vmul.f32 %v874, %v1551
      %v1724 = vmul.f32 %v876, %v1553
      %v1725 = vmul.f32 %v623, %v1300
      %v1726 = vmul.f32 %v625, %v1302
      %v1727 = vmul.f32 %v880, %v1557
      %v1728 = vmul.f32 %v882, %v1559
      %v1729 = vmul.f32 %v629, %v1306
      %v1730 = vmul.f32 %v631, %v1308
      %v1731 = vmul.f32 %v886, %v1563
      %v1732 = vmul.f32 %v888, %v1565
      %v1733 = vmul.f32 %v635, %v1312
      %v1734 = vmul.f32 %v637, %v1314
      %v1735 = vmul.f32 %v892, %v1569
      %v1736 = vmul.f32 %v894, %v1571
      %v1737 = vmul.f32 %v641, %v1318
      %v1738 = vmul.f32 %v643, %v1320
      %v1739 = vmul.f32 %v898, %v1575
      %v1740 = vmul.f32 %v900, %v1577
      %v1741 = vmul.f32 %v647, %v1324
      %v1742 = vmul.f32 %v649, %v1326
      %v1743 = vmul.f32 %v904, %v1581
      %v1744 = vmul.f32 %v906, %v1583
      %v1745 = vmul.f32 %v653, %v1330
      %v1746 = vmul.f32 %v655, %v1332
      %v1747 = vmul.f32 %v910, %v1587
      %v1748 = vmul.f32 %v912, %v1589
      %v1749 = vmul.f32 %v659, %v1336
      %v1750 = vmul.f32 %v661, %v1338
      %v1751 = vmul.f32 %v916, %v1593
      %v1752 = vmul.f32 %v918, %v1595
      %v1753 = vmul.f32 %v665, %v1342
      %v1754 = vmul.f32 %v667, %v1344
      %v1755 = vmul.f32 %v922, %v1599
      %v1756 = vmul.f32 %v924, %v1601
      %v1757 = vmul.f32 %v671, %v1348
      %v1758 = vmul.f32 %v673, %v1350
      %v1759 = vmul.f32 %v928, %v1605
      %v1760 = vmul.f32 %v930, %v1607
      %v1761 = vmul.f32 %v677, %v1354
      %v1762 = vmul.f32 %v679, %v1356
      %v1763 = vmul.f32 %v934, %v1611
      %v1764 = vmul.f32 %v936, %v1613
      %v1765 = vmul.f32 %v683, %v1360
      %v1766 = vmul.f32 %v685, %v1362
      %v1767 = vmul.f32 %v940, %v1617
      %v1768 = vmul.f32 %v942, %v1619
      %v1769 = vmul.f32 %v689, %v1366
      %v1770 = vmul.f32 %v691, %v1368
      %v1771 = vmul.f32 %v946, %v1623
      %v1772 = vmul.f32 %v948, %v1625
      %v1773 = vmul.f32 %v695, %v1372
      %v1774 = vmul.f32 %v697, %v1374
      %v1775 = vmul.f32 %v952, %v1629
      %v1776 = vmul.f32 %v954, %v1631
      %v1777 = vmul.f32 %v701, %v1378
      %v1778 = vmul.f32 %v703, %v1380
      %v1779 = vmul.f32 %v958, %v1635
      %v1780 = vmul.f32 %v960, %v1637
      %v1781 = vmul.f32 %v707, %v1384
      %v1782 = vmul.f32 %v709, %v1386
      %v1783 = vmul.f32 %v964, %v1641
      %v1784 = vmul.f32 %v966, %v1643
      %v1785 = vmul.f32 %v713, %v1390
      %v1786 = vmul.f32 %v715, %v1392
      %v1787 = vmul.f32 %v970, %v1647
      %v1788 = vmul.f32 %v972, %v1649
      %v1789 = vmul.f32 %v719, %v1396
      %v1790 = vmul.f32 %v721, %v1398
      %v1791 = vmul.f32 %v976, %v1653
      %v1792 = vmul.f32 %v978, %v1655
      %v1793 = vmul.f32 %v725, %v1402
      %v1794 = vmul.f32 %v727, %v1404
      %v1795 = vmul.f32 %v982, %v1659
      %v1796 = vmul.f32 %v984, %v1661
      %v1797 = vmul.f32 %v731, %v1408
      %v1798 = vmul.f32 %v733, %v1410
      %v1799 = vmul.f32 %v988, %v1665
      %v1800 = vmul.f32 %v990, %v1667
      %v1801 = vmul.f32 %v737, %v1414
      %v1802 = vmul.f32 %v739, %v1416
      %v1803 = vmul.f32 %v994, %v1671
      %v1804 = vmul.f32 %v996, %v1673
      %v1805 = vmul.f32 %v743, %v1420
      %v1806 = vmul.f32 %v745, %v1422
      %v1807 = vmul.f32 %v1000, %v1677
      %v1808 = vmul.f32 %v1002, %v1679
      %v1809 = vld [vmem:[%s6] sm:$0xff]
      %v1810 = vld [vmem:[%s6 + $0x8] sm:$0xff]
      %v1811 = vld [vmem:[%s6 + $0x10] sm:$0xff]
      %v1812 = vld [vmem:[%s6 + $0x18] sm:$0xff]
      %v1813 = vld [vmem:[%s6 + $0x20] sm:$0xff]
      %v1814 = vld [vmem:[%s6 + $0x28] sm:$0xff]
      %v1815 = vld [vmem:[%s6 + $0x30] sm:$0xff]
      %v1816 = vld [vmem:[%s6 + $0x38] sm:$0xff]
      %v1817 = vld [vmem:[%s6 + $0x40] sm:$0xff]
      %v1818 = vld [vmem:[%s6 + $0x48] sm:$0xff]
      %v1819 = vld [vmem:[%s6 + $0x50] sm:$0xff]
      %v1820 = vld [vmem:[%s6 + $0x58] sm:$0xff]
      %v1821 = vld [vmem:[%s6 + $0x60] sm:$0xff]
      %v1822 = vld [vmem:[%s6 + $0x68] sm:$0xff]
      %v1823 = vld [vmem:[%s6 + $0x70] sm:$0xff]
      %v1824 = vld [vmem:[%s6 + $0x78] sm:$0xff]
      %v1825 = vld [vmem:[%s6 + $0x80] sm:$0xff]
      %v1826 = vld [vmem:[%s6 + $0x88] sm:$0xff]
      %v1827 = vld [vmem:[%s6 + $0x90] sm:$0xff]
      %v1828 = vld [vmem:[%s6 + $0x98] sm:$0xff]
      %v1829 = vld [vmem:[%s6 + $0xa0] sm:$0xff]
      %v1830 = vld [vmem:[%s6 + $0xa8] sm:$0xff]
      %v1831 = vld [vmem:[%s6 + $0xb0] sm:$0xff]
      %v1832 = vld [vmem:[%s6 + $0xb8] sm:$0xff]
      %v1833 = vld [vmem:[%s6 + $0xc0] sm:$0xff]
      %v1834 = vld [vmem:[%s6 + $0xc8] sm:$0xff]
      %v1835 = vld [vmem:[%s6 + $0xd0] sm:$0xff]
      %v1836 = vld [vmem:[%s6 + $0xd8] sm:$0xff]
      %v1837 = vld [vmem:[%s6 + $0xe0] sm:$0xff]
      %v1838 = vld [vmem:[%s6 + $0xe8] sm:$0xff]
      %v1839 = vld [vmem:[%s6 + $0xf0] sm:$0xff]
      %v1840 = vld [vmem:[%s6 + $0xf8] sm:$0xff]
      %v1841 = vld [vmem:[%s6 + $0x100] sm:$0xff]
      %v1842 = vld [vmem:[%s6 + $0x108] sm:$0xff]
      %v1843 = vld [vmem:[%s6 + $0x110] sm:$0xff]
      %v1844 = vld [vmem:[%s6 + $0x118] sm:$0xff]
      %v1845 = vld [vmem:[%s6 + $0x120] sm:$0xff]
      %v1846 = vld [vmem:[%s6 + $0x128] sm:$0xff]
      %v1847 = vld [vmem:[%s6 + $0x130] sm:$0xff]
      %v1848 = vld [vmem:[%s6 + $0x138] sm:$0xff]
      %v1849 = vld [vmem:[%s6 + $0x140] sm:$0xff]
      %v1850 = vld [vmem:[%s6 + $0x148] sm:$0xff]
      %v1851 = vld [vmem:[%s6 + $0x150] sm:$0xff]
      %v1852 = vld [vmem:[%s6 + $0x158] sm:$0xff]
      %v1853 = vld [vmem:[%s6 + $0x160] sm:$0xff]
      %v1854 = vld [vmem:[%s6 + $0x168] sm:$0xff]
      %v1855 = vld [vmem:[%s6 + $0x170] sm:$0xff]
      %v1856 = vld [vmem:[%s6 + $0x178] sm:$0xff]
      %v1857 = vld [vmem:[%s6 + $0x180] sm:$0xff]
      %v1858 = vld [vmem:[%s6 + $0x188] sm:$0xff]
      %v1859 = vld [vmem:[%s6 + $0x190] sm:$0xff]
      %v1860 = vld [vmem:[%s6 + $0x198] sm:$0xff]
      %v1861 = vld [vmem:[%s6 + $0x1a0] sm:$0xff]
      %v1862 = vld [vmem:[%s6 + $0x1a8] sm:$0xff]
      %v1863 = vld [vmem:[%s6 + $0x1b0] sm:$0xff]
      %v1864 = vld [vmem:[%s6 + $0x1b8] sm:$0xff]
      %v1865 = vld [vmem:[%s6 + $0x1c0] sm:$0xff]
      %v1866 = vld [vmem:[%s6 + $0x1c8] sm:$0xff]
      %v1867 = vld [vmem:[%s6 + $0x1d0] sm:$0xff]
      %v1868 = vld [vmem:[%s6 + $0x1d8] sm:$0xff]
      %v1869 = vld [vmem:[%s6 + $0x1e0] sm:$0xff]
      %v1870 = vld [vmem:[%s6 + $0x1e8] sm:$0xff]
      %v1871 = vld [vmem:[%s6 + $0x1f0] sm:$0xff]
      %v1872 = vld [vmem:[%s6 + $0x1f8] sm:$0xff]
      %v1873 = vld [vmem:[%s7] sm:$0x1]
      %v1875 = vlaneseq
      %v1876 = vshrl.u32 %v1875, 7
      %v1877 = vsub.s32 0, %v1876
      %v1878 = vrot.slane %v1873, %v1877
      %1880 = vmatprep.subr.mxu0 0.0
      %1881 = vmatpush1.msra.mxu0 %v1824
      %1882 = vmatprep.subr.mxu0 0.0
      %1883 = vmatpush1.msra.mxu0 %v1823
      %1884 = vmatprep.subr.mxu0 0.0
      %1885 = vmatpush1.msra.mxu0 %v1822
      %1886 = vmatprep.subr.mxu0 0.0
      %1887 = vmatpush1.msra.mxu0 %v1821
      %1888 = vmatprep.subr.mxu0 0.0
      %1889 = vmatpush1.msra.mxu0 %v1820
      %1890 = vmatprep.subr.mxu0 0.0
      %1891 = vmatpush1.msra.mxu0 %v1819
      %1892 = vmatprep.subr.mxu0 0.0
      %1893 = vmatpush1.msra.mxu0 %v1818
      %1894 = vmatprep.subr.mxu0 0.0
      %1895 = vmatpush1.msra.mxu0 %v1817
      %1896 = vmatprep.subr.mxu0 0.0
      %1897 = vmatpush1.msra.mxu0 %v1816
      %1898 = vmatprep.subr.mxu0 0.0
      %1899 = vmatpush1.msra.mxu0 %v1815
      %1900 = vmatprep.subr.mxu0 0.0
      %1901 = vmatpush1.msra.mxu0 %v1814
      %1902 = vmatprep.subr.mxu0 0.0
      %1903 = vmatpush1.msra.mxu0 %v1813
      %1904 = vmatprep.subr.mxu0 0.0
      %1905 = vmatpush1.msra.mxu0 %v1812
      %1906 = vmatprep.subr.mxu0 0.0
      %1907 = vmatpush1.msra.mxu0 %v1811
      %1908 = vmatprep.subr.mxu0 0.0
      %1909 = vmatpush1.msra.mxu0 %v1810
      %1910 = vmatprep.subr.mxu0 0.0
      %1911 = vmatpush1.msra.mxu0 %v1809
      %1912 = vmatprep.subr.mxu0 0.0
      %1913 = vmatpush2.msra.mxu0 %v1840
      %1914 = vmatprep.subr.mxu0 0.0
      %1915 = vmatpush2.msra.mxu0 %v1839
      %1916 = vmatprep.subr.mxu0 0.0
      %1917 = vmatpush2.msra.mxu0 %v1838
      %1918 = vmatprep.subr.mxu0 0.0
      %1919 = vmatpush2.msra.mxu0 %v1837
      %1920 = vmatprep.subr.mxu0 0.0
      %1921 = vmatpush2.msra.mxu0 %v1836
      %1922 = vmatprep.subr.mxu0 0.0
      %1923 = vmatpush2.msra.mxu0 %v1835
      %1924 = vmatprep.subr.mxu0 0.0
      %1925 = vmatpush2.msra.mxu0 %v1834
      %1926 = vmatprep.subr.mxu0 0.0
      %1927 = vmatpush2.msra.mxu0 %v1833
      %1928 = vmatprep.subr.mxu0 0.0
      %1929 = vmatpush2.msra.mxu0 %v1832
      %1930 = vmatprep.subr.mxu0 0.0
      %1931 = vmatpush2.msra.mxu0 %v1831
      %1932 = vmatprep.subr.mxu0 0.0
      %1933 = vmatpush2.msra.mxu0 %v1830
      %1934 = vmatprep.subr.mxu0 0.0
      %1935 = vmatpush2.msra.mxu0 %v1829
      %1936 = vmatprep.subr.mxu0 0.0
      %1937 = vmatpush2.msra.mxu0 %v1828
      %1938 = vmatprep.subr.mxu0 0.0
      %1939 = vmatpush2.msra.mxu0 %v1827
      %1940 = vmatprep.subr.mxu0 0.0
      %1941 = vmatpush2.msra.mxu0 %v1826
      %1942 = vmatprep.subr.mxu0 0.0
      %1943 = vmatpush2.msra.mxu0 %v1825
      %1944 = vmatprep.mubr.f32.mxu0 %v1682
      %1945 = vmatmul.mubr.f32.gmra.mxu0 %v1681
      %v1946 = vpop.f32.mrf.mxu0
      %v1947 = vadd.f32 %v1878, %v1946
      %v1948 = vpop.f32.mrf.mxu0
      %1949 = vmatprep.mubr.f32.mxu0 %v1686
      %1950 = vmatmul.mubr.f32.gmra.mxu0 %v1685
      %v1951 = vpop.f32.mrf.mxu0
      %v1952 = vadd.f32 %v1878, %v1951
      %v1953 = vpop.f32.mrf.mxu0
      %1954 = vmatprep.mubr.f32.mxu0 %v1690
      %1955 = vmatmul.mubr.f32.gmra.mxu0 %v1689
      %v1956 = vpop.f32.mrf.mxu0
      %v1957 = vadd.f32 %v1878, %v1956
      %v1958 = vpop.f32.mrf.mxu0
      %1959 = vmatprep.mubr.f32.mxu0 %v1694
      %1960 = vmatmul.mubr.f32.gmra.mxu0 %v1693
      %v1961 = vpop.f32.mrf.mxu0
      %v1962 = vadd.f32 %v1878, %v1961
      %v1963 = vpop.f32.mrf.mxu0
      %1964 = vmatprep.mubr.f32.mxu0 %v1698
      %1965 = vmatmul.mubr.f32.gmra.mxu0 %v1697
      %v1966 = vpop.f32.mrf.mxu0
      %v1967 = vadd.f32 %v1878, %v1966
      %v1968 = vpop.f32.mrf.mxu0
      %1969 = vmatprep.mubr.f32.mxu0 %v1702
      %1970 = vmatmul.mubr.f32.gmra.mxu0 %v1701
      %v1971 = vpop.f32.mrf.mxu0
      %v1972 = vadd.f32 %v1878, %v1971
      %v1973 = vpop.f32.mrf.mxu0
      %1974 = vmatprep.mubr.f32.mxu0 %v1706
      %1975 = vmatmul.mubr.f32.gmra.mxu0 %v1705
      %v1976 = vpop.f32.mrf.mxu0
      %v1977 = vadd.f32 %v1878, %v1976
      %v1978 = vpop.f32.mrf.mxu0
      %1979 = vmatprep.mubr.f32.mxu0 %v1710
      %1980 = vmatmul.mubr.f32.gmra.mxu0 %v1709
      %v1981 = vpop.f32.mrf.mxu0
      %v1982 = vadd.f32 %v1878, %v1981
      %v1983 = vpop.f32.mrf.mxu0
      %1984 = vmatprep.mubr.f32.mxu0 %v1714
      %1985 = vmatmul.mubr.f32.gmra.mxu0 %v1713
      %v1986 = vpop.f32.mrf.mxu0
      %v1987 = vadd.f32 %v1878, %v1986
      %v1988 = vpop.f32.mrf.mxu0
      %1989 = vmatprep.mubr.f32.mxu0 %v1718
      %1990 = vmatmul.mubr.f32.gmra.mxu0 %v1717
      %v1991 = vpop.f32.mrf.mxu0
      %v1992 = vadd.f32 %v1878, %v1991
      %v1993 = vpop.f32.mrf.mxu0
      %1994 = vmatprep.mubr.f32.mxu0 %v1722
      %1995 = vmatmul.mubr.f32.gmra.mxu0 %v1721
      %v1996 = vpop.f32.mrf.mxu0
      %v1997 = vadd.f32 %v1878, %v1996
      %v1998 = vpop.f32.mrf.mxu0
      %1999 = vmatprep.mubr.f32.mxu0 %v1726
      %2000 = vmatmul.mubr.f32.gmra.mxu0 %v1725
      %v2001 = vpop.f32.mrf.mxu0
      %v2002 = vadd.f32 %v1878, %v2001
      %v2003 = vpop.f32.mrf.mxu0
      %2004 = vmatprep.mubr.f32.mxu0 %v1730
      %2005 = vmatmul.mubr.f32.gmra.mxu0 %v1729
      %v2006 = vpop.f32.mrf.mxu0
      %v2007 = vadd.f32 %v1878, %v2006
      %v2008 = vpop.f32.mrf.mxu0
      %2009 = vmatprep.mubr.f32.mxu0 %v1734
      %2010 = vmatmul.mubr.f32.gmra.mxu0 %v1733
      %v2011 = vpop.f32.mrf.mxu0
      %v2012 = vadd.f32 %v1878, %v2011
      %v2013 = vpop.f32.mrf.mxu0
      %2014 = vmatprep.mubr.f32.mxu0 %v1738
      %2015 = vmatmul.mubr.f32.gmra.mxu0 %v1737
      %v2016 = vpop.f32.mrf.mxu0
      %v2017 = vadd.f32 %v1878, %v2016
      %v2018 = vpop.f32.mrf.mxu0
      %2019 = vmatprep.mubr.f32.mxu0 %v1742
      %2020 = vmatmul.mubr.f32.gmra.mxu0 %v1741
      %v2021 = vpop.f32.mrf.mxu0
      %v2022 = vadd.f32 %v1878, %v2021
      %v2023 = vpop.f32.mrf.mxu0
      %2024 = vmatprep.mubr.f32.mxu0 %v1746
      %2025 = vmatmul.mubr.f32.gmra.mxu0 %v1745
      %v2026 = vpop.f32.mrf.mxu0
      %v2027 = vadd.f32 %v1878, %v2026
      %v2028 = vpop.f32.mrf.mxu0
      %2029 = vmatprep.mubr.f32.mxu0 %v1750
      %2030 = vmatmul.mubr.f32.gmra.mxu0 %v1749
      %v2031 = vpop.f32.mrf.mxu0
      %v2032 = vadd.f32 %v1878, %v2031
      %v2033 = vpop.f32.mrf.mxu0
      %2034 = vmatprep.mubr.f32.mxu0 %v1754
      %2035 = vmatmul.mubr.f32.gmra.mxu0 %v1753
      %v2036 = vpop.f32.mrf.mxu0
      %v2037 = vadd.f32 %v1878, %v2036
      %v2038 = vpop.f32.mrf.mxu0
      %2039 = vmatprep.mubr.f32.mxu0 %v1758
      %2040 = vmatmul.mubr.f32.gmra.mxu0 %v1757
      %v2041 = vpop.f32.mrf.mxu0
      %v2042 = vadd.f32 %v1878, %v2041
      %v2043 = vpop.f32.mrf.mxu0
      %2044 = vmatprep.mubr.f32.mxu0 %v1762
      %2045 = vmatmul.mubr.f32.gmra.mxu0 %v1761
      %v2046 = vpop.f32.mrf.mxu0
      %v2047 = vadd.f32 %v1878, %v2046
      %v2048 = vpop.f32.mrf.mxu0
      %2049 = vmatprep.mubr.f32.mxu0 %v1766
      %2050 = vmatmul.mubr.f32.gmra.mxu0 %v1765
      %v2051 = vpop.f32.mrf.mxu0
      %v2052 = vadd.f32 %v1878, %v2051
      %v2053 = vpop.f32.mrf.mxu0
      %2054 = vmatprep.mubr.f32.mxu0 %v1770
      %2055 = vmatmul.mubr.f32.gmra.mxu0 %v1769
      %v2056 = vpop.f32.mrf.mxu0
      %v2057 = vadd.f32 %v1878, %v2056
      %v2058 = vpop.f32.mrf.mxu0
      %2059 = vmatprep.mubr.f32.mxu0 %v1774
      %2060 = vmatmul.mubr.f32.gmra.mxu0 %v1773
      %v2061 = vpop.f32.mrf.mxu0
      %v2062 = vadd.f32 %v1878, %v2061
      %v2063 = vpop.f32.mrf.mxu0
      %2064 = vmatprep.mubr.f32.mxu0 %v1778
      %2065 = vmatmul.mubr.f32.gmra.mxu0 %v1777
      %v2066 = vpop.f32.mrf.mxu0
      %v2067 = vadd.f32 %v1878, %v2066
      %v2068 = vpop.f32.mrf.mxu0
      %2069 = vmatprep.mubr.f32.mxu0 %v1782
      %2070 = vmatmul.mubr.f32.gmra.mxu0 %v1781
      %v2071 = vpop.f32.mrf.mxu0
      %v2072 = vadd.f32 %v1878, %v2071
      %v2073 = vpop.f32.mrf.mxu0
      %2074 = vmatprep.mubr.f32.mxu0 %v1786
      %2075 = vmatmul.mubr.f32.gmra.mxu0 %v1785
      %v2076 = vpop.f32.mrf.mxu0
      %v2077 = vadd.f32 %v1878, %v2076
      %v2078 = vpop.f32.mrf.mxu0
      %2079 = vmatprep.mubr.f32.mxu0 %v1790
      %2080 = vmatmul.mubr.f32.gmra.mxu0 %v1789
      %v2081 = vpop.f32.mrf.mxu0
      %v2082 = vadd.f32 %v1878, %v2081
      %v2083 = vpop.f32.mrf.mxu0
      %2084 = vmatprep.mubr.f32.mxu0 %v1794
      %2085 = vmatmul.mubr.f32.gmra.mxu0 %v1793
      %v2086 = vpop.f32.mrf.mxu0
      %v2087 = vadd.f32 %v1878, %v2086
      %v2088 = vpop.f32.mrf.mxu0
      %2089 = vmatprep.mubr.f32.mxu0 %v1798
      %2090 = vmatmul.mubr.f32.gmra.mxu0 %v1797
      %v2091 = vpop.f32.mrf.mxu0
      %v2092 = vadd.f32 %v1878, %v2091
      %v2093 = vpop.f32.mrf.mxu0
      %2094 = vmatprep.mubr.f32.mxu0 %v1802
      %2095 = vmatmul.mubr.f32.gmra.mxu0 %v1801
      %v2096 = vpop.f32.mrf.mxu0
      %v2097 = vadd.f32 %v1878, %v2096
      %v2098 = vpop.f32.mrf.mxu0
      %2099 = vmatprep.mubr.f32.mxu0 %v1806
      %2100 = vmatmul.mubr.f32.gmra.mxu0 %v1805
      %v2101 = vpop.f32.mrf.mxu0
      %v2102 = vadd.f32 %v1878, %v2101
      %v2103 = vpop.f32.mrf.mxu0
      %2104 = vdwg.mxu0
      %2105 = vmatprep.subr.mxu0 0.0
      %2106 = vmatpush1.msra.mxu0 %v1856
      %2107 = vmatprep.subr.mxu0 0.0
      %2108 = vmatpush1.msra.mxu0 %v1855
      %2109 = vmatprep.subr.mxu0 0.0
      %2110 = vmatpush1.msra.mxu0 %v1854
      %2111 = vmatprep.subr.mxu0 0.0
      %2112 = vmatpush1.msra.mxu0 %v1853
      %2113 = vmatprep.subr.mxu0 0.0
      %2114 = vmatpush1.msra.mxu0 %v1852
      %2115 = vmatprep.subr.mxu0 0.0
      %2116 = vmatpush1.msra.mxu0 %v1851
      %2117 = vmatprep.subr.mxu0 0.0
      %2118 = vmatpush1.msra.mxu0 %v1850
      %2119 = vmatprep.subr.mxu0 0.0
      %2120 = vmatpush1.msra.mxu0 %v1849
      %2121 = vmatprep.subr.mxu0 0.0
      %2122 = vmatpush1.msra.mxu0 %v1848
      %2123 = vmatprep.subr.mxu0 0.0
      %2124 = vmatpush1.msra.mxu0 %v1847
      %2125 = vmatprep.subr.mxu0 0.0
      %2126 = vmatpush1.msra.mxu0 %v1846
      %2127 = vmatprep.subr.mxu0 0.0
      %2128 = vmatpush1.msra.mxu0 %v1845
      %2129 = vmatprep.subr.mxu0 0.0
      %2130 = vmatpush1.msra.mxu0 %v1844
      %2131 = vmatprep.subr.mxu0 0.0
      %2132 = vmatpush1.msra.mxu0 %v1843
      %2133 = vmatprep.subr.mxu0 0.0
      %2134 = vmatpush1.msra.mxu0 %v1842
      %2135 = vmatprep.subr.mxu0 0.0
      %2136 = vmatpush1.msra.mxu0 %v1841
      %2137 = vmatprep.subr.mxu0 0.0
      %2138 = vmatpush2.msra.mxu0 %v1872
      %2139 = vmatprep.subr.mxu0 0.0
      %2140 = vmatpush2.msra.mxu0 %v1871
      %2141 = vmatprep.subr.mxu0 0.0
      %2142 = vmatpush2.msra.mxu0 %v1870
      %2143 = vmatprep.subr.mxu0 0.0
      %2144 = vmatpush2.msra.mxu0 %v1869
      %2145 = vmatprep.subr.mxu0 0.0
      %2146 = vmatpush2.msra.mxu0 %v1868
      %2147 = vmatprep.subr.mxu0 0.0
      %2148 = vmatpush2.msra.mxu0 %v1867
      %2149 = vmatprep.subr.mxu0 0.0
      %2150 = vmatpush2.msra.mxu0 %v1866
      %2151 = vmatprep.subr.mxu0 0.0
      %2152 = vmatpush2.msra.mxu0 %v1865
      %2153 = vmatprep.subr.mxu0 0.0
      %2154 = vmatpush2.msra.mxu0 %v1864
      %2155 = vmatprep.subr.mxu0 0.0
      %2156 = vmatpush2.msra.mxu0 %v1863
      %2157 = vmatprep.subr.mxu0 0.0
      %2158 = vmatpush2.msra.mxu0 %v1862
      %2159 = vmatprep.subr.mxu0 0.0
      %2160 = vmatpush2.msra.mxu0 %v1861
      %2161 = vmatprep.subr.mxu0 0.0
      %2162 = vmatpush2.msra.mxu0 %v1860
      %2163 = vmatprep.subr.mxu0 0.0
      %2164 = vmatpush2.msra.mxu0 %v1859
      %2165 = vmatprep.subr.mxu0 0.0
      %2166 = vmatpush2.msra.mxu0 %v1858
      %2167 = vmatprep.subr.mxu0 0.0
      %2168 = vmatpush2.msra.mxu0 %v1857
      %2169 = vmatprep.mubr.f32.mxu0 %v1684
      %2170 = vmatmul.mubr.f32.gmra.mxu0 %v1683
      %v2171 = vpop.f32.mrf.mxu0
      %v2172 = vadd.f32 %v1947, %v2171
      %v2173 = vpop.f32.mrf.mxu0
      %2174 = vmatprep.mubr.f32.mxu0 %v1688
      %2175 = vmatmul.mubr.f32.gmra.mxu0 %v1687
      %v2176 = vpop.f32.mrf.mxu0
      %v2177 = vadd.f32 %v1952, %v2176
      %v2178 = vpop.f32.mrf.mxu0
      %2179 = vmatprep.mubr.f32.mxu0 %v1692
      %2180 = vmatmul.mubr.f32.gmra.mxu0 %v1691
      %v2181 = vpop.f32.mrf.mxu0
      %v2182 = vadd.f32 %v1957, %v2181
      %v2183 = vpop.f32.mrf.mxu0
      %2184 = vmatprep.mubr.f32.mxu0 %v1696
      %2185 = vmatmul.mubr.f32.gmra.mxu0 %v1695
      %v2186 = vpop.f32.mrf.mxu0
      %v2187 = vadd.f32 %v1962, %v2186
      %v2188 = vpop.f32.mrf.mxu0
      %2189 = vmatprep.mubr.f32.mxu0 %v1700
      %2190 = vmatmul.mubr.f32.gmra.mxu0 %v1699
      %v2191 = vpop.f32.mrf.mxu0
      %v2192 = vadd.f32 %v1967, %v2191
      %v2193 = vpop.f32.mrf.mxu0
      %2194 = vmatprep.mubr.f32.mxu0 %v1704
      %2195 = vmatmul.mubr.f32.gmra.mxu0 %v1703
      %v2196 = vpop.f32.mrf.mxu0
      %v2197 = vadd.f32 %v1972, %v2196
      %v2198 = vpop.f32.mrf.mxu0
      %2199 = vmatprep.mubr.f32.mxu0 %v1708
      %2200 = vmatmul.mubr.f32.gmra.mxu0 %v1707
      %v2201 = vpop.f32.mrf.mxu0
      %v2202 = vadd.f32 %v1977, %v2201
      %v2203 = vpop.f32.mrf.mxu0
      %2204 = vmatprep.mubr.f32.mxu0 %v1712
      %2205 = vmatmul.mubr.f32.gmra.mxu0 %v1711
      %v2206 = vpop.f32.mrf.mxu0
      %v2207 = vadd.f32 %v1982, %v2206
      %v2208 = vpop.f32.mrf.mxu0
      %2209 = vmatprep.mubr.f32.mxu0 %v1716
      %2210 = vmatmul.mubr.f32.gmra.mxu0 %v1715
      %v2211 = vpop.f32.mrf.mxu0
      %v2212 = vadd.f32 %v1987, %v2211
      %v2213 = vpop.f32.mrf.mxu0
      %2214 = vmatprep.mubr.f32.mxu0 %v1720
      %2215 = vmatmul.mubr.f32.gmra.mxu0 %v1719
      %v2216 = vpop.f32.mrf.mxu0
      %v2217 = vadd.f32 %v1992, %v2216
      %v2218 = vpop.f32.mrf.mxu0
      %2219 = vmatprep.mubr.f32.mxu0 %v1724
      %2220 = vmatmul.mubr.f32.gmra.mxu0 %v1723
      %v2221 = vpop.f32.mrf.mxu0
      %v2222 = vadd.f32 %v1997, %v2221
      %v2223 = vpop.f32.mrf.mxu0
      %2224 = vmatprep.mubr.f32.mxu0 %v1728
      %2225 = vmatmul.mubr.f32.gmra.mxu0 %v1727
      %v2226 = vpop.f32.mrf.mxu0
      %v2227 = vadd.f32 %v2002, %v2226
      %v2228 = vpop.f32.mrf.mxu0
      %2229 = vmatprep.mubr.f32.mxu0 %v1732
      %2230 = vmatmul.mubr.f32.gmra.mxu0 %v1731
      %v2231 = vpop.f32.mrf.mxu0
      %v2232 = vadd.f32 %v2007, %v2231
      %v2233 = vpop.f32.mrf.mxu0
      %2234 = vmatprep.mubr.f32.mxu0 %v1736
      %2235 = vmatmul.mubr.f32.gmra.mxu0 %v1735
      %v2236 = vpop.f32.mrf.mxu0
      %v2237 = vadd.f32 %v2012, %v2236
      %v2238 = vpop.f32.mrf.mxu0
      %2239 = vmatprep.mubr.f32.mxu0 %v1740
      %2240 = vmatmul.mubr.f32.gmra.mxu0 %v1739
      %v2241 = vpop.f32.mrf.mxu0
      %v2242 = vadd.f32 %v2017, %v2241
      %v2243 = vpop.f32.mrf.mxu0
      %2244 = vmatprep.mubr.f32.mxu0 %v1744
      %2245 = vmatmul.mubr.f32.gmra.mxu0 %v1743
      %v2246 = vpop.f32.mrf.mxu0
      %v2247 = vadd.f32 %v2022, %v2246
      %v2248 = vpop.f32.mrf.mxu0
      %2249 = vmatprep.mubr.f32.mxu0 %v1748
      %2250 = vmatmul.mubr.f32.gmra.mxu0 %v1747
      %v2251 = vpop.f32.mrf.mxu0
      %v2252 = vadd.f32 %v2027, %v2251
      %v2253 = vpop.f32.mrf.mxu0
      %2254 = vmatprep.mubr.f32.mxu0 %v1752
      %2255 = vmatmul.mubr.f32.gmra.mxu0 %v1751
      %v2256 = vpop.f32.mrf.mxu0
      %v2257 = vadd.f32 %v2032, %v2256
      %v2258 = vpop.f32.mrf.mxu0
      %2259 = vmatprep.mubr.f32.mxu0 %v1756
      %2260 = vmatmul.mubr.f32.gmra.mxu0 %v1755
      %v2261 = vpop.f32.mrf.mxu0
      %v2262 = vadd.f32 %v2037, %v2261
      %v2263 = vpop.f32.mrf.mxu0
      %2264 = vmatprep.mubr.f32.mxu0 %v1760
      %2265 = vmatmul.mubr.f32.gmra.mxu0 %v1759
      %v2266 = vpop.f32.mrf.mxu0
      %v2267 = vadd.f32 %v2042, %v2266
      %v2268 = vpop.f32.mrf.mxu0
      %2269 = vmatprep.mubr.f32.mxu0 %v1764
      %2270 = vmatmul.mubr.f32.gmra.mxu0 %v1763
      %v2271 = vpop.f32.mrf.mxu0
      %v2272 = vadd.f32 %v2047, %v2271
      %v2273 = vpop.f32.mrf.mxu0
      %2274 = vmatprep.mubr.f32.mxu0 %v1768
      %2275 = vmatmul.mubr.f32.gmra.mxu0 %v1767
      %v2276 = vpop.f32.mrf.mxu0
      %v2277 = vadd.f32 %v2052, %v2276
      %v2278 = vpop.f32.mrf.mxu0
      %2279 = vmatprep.mubr.f32.mxu0 %v1772
      %2280 = vmatmul.mubr.f32.gmra.mxu0 %v1771
      %v2281 = vpop.f32.mrf.mxu0
      %v2282 = vadd.f32 %v2057, %v2281
      %v2283 = vpop.f32.mrf.mxu0
      %2284 = vmatprep.mubr.f32.mxu0 %v1776
      %2285 = vmatmul.mubr.f32.gmra.mxu0 %v1775
      %v2286 = vpop.f32.mrf.mxu0
      %v2287 = vadd.f32 %v2062, %v2286
      %v2288 = vpop.f32.mrf.mxu0
      %2289 = vmatprep.mubr.f32.mxu0 %v1780
      %2290 = vmatmul.mubr.f32.gmra.mxu0 %v1779
      %v2291 = vpop.f32.mrf.mxu0
      %v2292 = vadd.f32 %v2067, %v2291
      %v2293 = vpop.f32.mrf.mxu0
      %2294 = vmatprep.mubr.f32.mxu0 %v1784
      %2295 = vmatmul.mubr.f32.gmra.mxu0 %v1783
      %v2296 = vpop.f32.mrf.mxu0
      %v2297 = vadd.f32 %v2072, %v2296
      %v2298 = vpop.f32.mrf.mxu0
      %2299 = vmatprep.mubr.f32.mxu0 %v1788
      %2300 = vmatmul.mubr.f32.gmra.mxu0 %v1787
      %v2301 = vpop.f32.mrf.mxu0
      %v2302 = vadd.f32 %v2077, %v2301
      %v2303 = vpop.f32.mrf.mxu0
      %2304 = vmatprep.mubr.f32.mxu0 %v1792
      %2305 = vmatmul.mubr.f32.gmra.mxu0 %v1791
      %v2306 = vpop.f32.mrf.mxu0
      %v2307 = vadd.f32 %v2082, %v2306
      %v2308 = vpop.f32.mrf.mxu0
      %2309 = vmatprep.mubr.f32.mxu0 %v1796
      %2310 = vmatmul.mubr.f32.gmra.mxu0 %v1795
      %v2311 = vpop.f32.mrf.mxu0
      %v2312 = vadd.f32 %v2087, %v2311
      %v2313 = vpop.f32.mrf.mxu0
      %2314 = vmatprep.mubr.f32.mxu0 %v1800
      %2315 = vmatmul.mubr.f32.gmra.mxu0 %v1799
      %v2316 = vpop.f32.mrf.mxu0
      %v2317 = vadd.f32 %v2092, %v2316
      %v2318 = vpop.f32.mrf.mxu0
      %2319 = vmatprep.mubr.f32.mxu0 %v1804
      %2320 = vmatmul.mubr.f32.gmra.mxu0 %v1803
      %v2321 = vpop.f32.mrf.mxu0
      %v2322 = vadd.f32 %v2097, %v2321
      %v2323 = vpop.f32.mrf.mxu0
      %2324 = vmatprep.mubr.f32.mxu0 %v1808
      %2325 = vmatmul.mubr.f32.gmra.mxu0 %v1807
      %v2326 = vpop.f32.mrf.mxu0
      %v2327 = vadd.f32 %v2102, %v2326
      %v2328 = vpop.f32.mrf.mxu0
      %2329 = vdwg.mxu0
      %2330 = vst [vmem:[%s329] sm:$0xff] %v2172
      %2331 = vst [vmem:[%s329 + $0x8] sm:$0xff] %v2177
      %2332 = vst [vmem:[%s329 + $0x10] sm:$0xff] %v2182
      %2333 = vst [vmem:[%s329 + $0x18] sm:$0xff] %v2187
      %2334 = vst [vmem:[%s329 + $0x20] sm:$0xff] %v2192
      %2335 = vst [vmem:[%s329 + $0x28] sm:$0xff] %v2197
      %2336 = vst [vmem:[%s329 + $0x30] sm:$0xff] %v2202
      %2337 = vst [vmem:[%s329 + $0x38] sm:$0xff] %v2207
      %2338 = vst [vmem:[%s329 + $0x40] sm:$0xff] %v2212
      %2339 = vst [vmem:[%s329 + $0x48] sm:$0xff] %v2217
      %2340 = vst [vmem:[%s329 + $0x50] sm:$0xff] %v2222
      %2341 = vst [vmem:[%s329 + $0x58] sm:$0xff] %v2227
      %2342 = vst [vmem:[%s329 + $0x60] sm:$0xff] %v2232
      %2343 = vst [vmem:[%s329 + $0x68] sm:$0xff] %v2237
      %2344 = vst [vmem:[%s329 + $0x70] sm:$0xff] %v2242
      %2345 = vst [vmem:[%s329 + $0x78] sm:$0xff] %v2247
      %2346 = vst [vmem:[%s329 + $0x80] sm:$0xff] %v2252
      %2347 = vst [vmem:[%s329 + $0x88] sm:$0xff] %v2257
      %2348 = vst [vmem:[%s329 + $0x90] sm:$0xff] %v2262
      %2349 = vst [vmem:[%s329 + $0x98] sm:$0xff] %v2267
      %2350 = vst [vmem:[%s329 + $0xa0] sm:$0xff] %v2272
      %2351 = vst [vmem:[%s329 + $0xa8] sm:$0xff] %v2277
      %2352 = vst [vmem:[%s329 + $0xb0] sm:$0xff] %v2282
      %2353 = vst [vmem:[%s329 + $0xb8] sm:$0xff] %v2287
      %2354 = vst [vmem:[%s329 + $0xc0] sm:$0xff] %v2292
      %2355 = vst [vmem:[%s329 + $0xc8] sm:$0xff] %v2297
      %2356 = vst [vmem:[%s329 + $0xd0] sm:$0xff] %v2302
      %2357 = vst [vmem:[%s329 + $0xd8] sm:$0xff] %v2307
      %2358 = vst [vmem:[%s329 + $0xe0] sm:$0xff] %v2312
      %2359 = vst [vmem:[%s329 + $0xe8] sm:$0xff] %v2317
      %2360 = vst [vmem:[%s329 + $0xf0] sm:$0xff] %v2322
      %2361 = vst [vmem:[%s329 + $0xf8] sm:$0xff] %v2327
      %s2362 = smul.u32 32, %s19
      %p2363 = scmp.lt.s32.totalorder %s2362, 63
      %s2364 = scalar_select %p2363, %s2362, 63
      %s2365 = smul.addr %s2364, 8
      %s2366 = scalar_lea.vmem %s8, %s2365
      // Predicated region
      $region53: #{bilinear_forward.1} parent=51 // pred_check
        %p2367 = pneg %p215
      $region54: #{bilinear_forward.1} parent=51 // pred_check_branch
        %2369 = sbr.rel (%p2367) target = $region56
      $region55: #{bilinear_forward.1} parent=51 // pred_region
        %s2370 = smul.u32 32, %s19
      $region56: #{bilinear_forward.1} parent=51 // pred_fallthru
        _
    $region52: #{bilinear_forward.1} parent=5 // pred_fallthru
      _
    %p2371 = scmp.le.s32.totalorder 2, %s14
    // Predicated region
    $region57: #{bilinear_forward.1} parent=5 // pred_check
      %p2372 = pneg %p2371
    $region58: #{bilinear_forward.1} parent=5 // pred_check_branch
      %2374 = sbr.rel (%p2372) target = $region60
    $region59: #{bilinear_forward.1} parent=5 // pred_region
      %s2375 = ssub.s32 %s14, 2
      // Predicated region
      $region61: #{bilinear_forward.1} parent=59 // pred_check
        %p2376 = pneg %p221
      $region62: #{bilinear_forward.1} parent=59 // pred_check_branch
        %2378 = sbr.rel (%p2376) target = $region64
      $region63: #{bilinear_forward.1} parent=59 // pred_region
        %s2379 = smul.u32 32, %s20
        %p2380 = scmp.lt.s32.totalorder %s2379, 63
        %s2381 = scalar_select %p2380, %s2379, 63
        %s2382 = smul.addr %s2381, 8
        %s2383 = scalar_lea.vmem %s8, %s2382
      $region64: #{bilinear_forward.1} parent=59 // pred_fallthru
        _
    $region60: #{bilinear_forward.1} parent=5 // pred_fallthru
      _
  $region6: #{bilinear_forward.1} parent=0 // loop_footer
    %s18 = sadd.s32 1, %s14
  $region7: #{bilinear_forward.1} parent=0 // loop_footer_branch
    %13 = sbr.rel target = $region3
  $region8: #{bilinear_forward.1} parent=0 // loop_exit
    _

</llo_original>
